<compile_context>
chip_gen: v6e
topology: v6e:2x2x1
jax: 0.10.0
libtpu: 0.0.40
codegen_flags: <defaults>
</compile_context>

<pallas_src>
import functools

import numpy as np

import jax
import jax.numpy as jnp
from jax import lax
from jax.experimental import pallas as pl
from jax.experimental.pallas import tpu as pltpu


# 3x3 taps as (dh, dw) spatial offsets, in (kh, kw) order.
_TAPS = tuple((dh, dw) for dh in (-1, 0, 1) for dw in (-1, 0, 1))


def _make_tap_masks(N, H, W):
    """[9, N*H*W] f32 {0,1}: validity of each 3x3 tap, per-image (no seam reads)."""
    HW = H * W
    pos = np.arange(N * HW)
    h = (pos % HW) // W      # per-image row
    w = pos % W              # per-image col
    rows = []
    for dh, dw in _TAPS:
        rows.append((h + dh >= 0) & (h + dh < H) & (w + dw >= 0) & (w + dw < W))
    return np.stack(rows).astype(np.float32)


def _fused_conv_kernel(mask_ref, x_ref, w1_ref, b1_ref, w2_ref, b2_ref,
                       o1_ref, o2_ref, xcol2_ref, *, H, W, N, Cp):
    """Fused conv3x3+ReLU -> conv3x3+ReLU for the whole (lane-merged) batch.

      mask_ref:  [9, N*HW]    f32 0/1 tap-validity masks (precomputed constant)
      x_ref:     [N, Cin, HW] input (unpadded channels)
      w1_ref:    [C1, 9*Cp]   conv1 weight, K ordered (kh, kw, cin_pad)
      b1_ref:    [C1, 1]
      w2_ref:    [C2, 9*C1]   conv2 weight, K ordered (kh, kw, cin)
      b2_ref:    [C2, 1]
      o1_ref:    [N, C1, HW]  relu(conv1(x))
      o2_ref:    [N, C2, HW]  relu(conv2(relu(conv1(x))))
      xcol2_ref: [9*C1, N*HW] VMEM im2col scratch for layer 2
    """
    HW = H * W
    L = N * HW
    C1 = o1_ref.shape[1]

    def tap(src, t, dh, dw):
        # Neighbor at spatial offset (dh, dw): lane-roll by dh*W + dw over the merged
        # [*, N*HW] slab; out-of-image lanes (incl. any seam/wrap reads) are zeroed by
        # the per-image mask -> implements the conv's zero padding exactly.
        d = dh * W + dw
        if d == 0:
            return src
        rolled = pltpu.roll(src, shift=(-d) % L, axis=1)
        return rolled * mask_ref[pl.ds(t, 1), :]

    # ---- gather the batch into one lane-dense [Cp, N*HW] slab ------------------
    x_all = jnp.concatenate([x_ref[n] for n in range(N)], axis=1)   # [Cin, L]
    cin = x_all.shape[0]
    if Cp > cin:
        x_all = jnp.pad(x_all, ((0, Cp - cin), (0, 0)))              # [Cp, L]

    # ---- layer 1: conv3x3 (Cin -> C1) + ReLU, im2col kept in registers ---------
    xcol1 = jnp.concatenate(
        [tap(x_all, t, dh, dw) for t, (dh, dw) in enumerate(_TAPS)], axis=0)  # [9*Cp, L]
    a1 = jnp.dot(w1_ref[...], xcol1, preferred_element_type=jnp.float32)      # [C1, L]
    a1 = jnp.maximum(a1 + b1_ref[...], 0.0)

    # ---- layer 2: conv3x3 (C1 -> C2) + ReLU, im2col staged in VMEM -------------
    for t, (dh, dw) in enumerate(_TAPS):
        xcol2_ref[pl.ds(t * C1, C1), :] = tap(a1, t, dh, dw)
    a2 = jnp.dot(w2_ref[...], xcol2_ref[...], preferred_element_type=jnp.float32)
    a2 = jnp.maximum(a2 + b2_ref[...], 0.0)                                   # [C2, L]

    # ---- scatter the lane-merged batch back to [N, C, HW] ----------------------
    for n in range(N):
        o1_ref[n] = a1[:, n * HW:(n + 1) * HW].astype(o1_ref.dtype)
        o2_ref[n] = a2[:, n * HW:(n + 1) * HW].astype(o2_ref.dtype)


def _prep_weight(w, cin_pad):
    """PyTorch OIHW [Cout, Cin, 3, 3] -> [Cout, 9*cin_pad], K ordered (kh, kw, cin)."""
    cout, cin, kh, kw = w.shape
    wt = jnp.transpose(w, (0, 2, 3, 1))                     # [Cout, 3, 3, Cin]
    if cin_pad > cin:
        wt = jnp.pad(wt, ((0, 0), (0, 0), (0, 0), (0, cin_pad - cin)))
    return wt.reshape(cout, kh * kw * cin_pad)


def prepack_params(params, *, cin_pad=8):
    """One-time (outside jit) packing of nn.Conv2d params for the kernel."""
    c1 = params["w1"].shape[0]
    return dict(
        w1k=_prep_weight(params["w1"], cin_pad),            # [C1, 9*cin_pad]
        b1k=params["b1"].reshape(-1, 1),                     # [C1, 1]
        w2k=_prep_weight(params["w2"], c1),                  # [C2, 9*C1]
        b2k=params["b2"].reshape(-1, 1),                     # [C2, 1]
    )


def fused_double_conv_relu(x_nchw, w1k, b1k, w2k, b2k, *, cin_pad=8):
    N, Cin, H, W = x_nchw.shape
    HW = H * W
    L = N * HW
    C1, K1 = w1k.shape
    C2, K2 = w2k.shape
    assert K1 == 9 * cin_pad and K2 == 9 * C1 and Cin <= cin_pad

    # Free reshape only -- no pad, no transpose, no weight prep inside the jit.
    x_flat = x_nchw.reshape(N, Cin, HW)
    mask = jnp.asarray(_make_tap_masks(N, H, W))             # compile-time constant

    kernel = functools.partial(_fused_conv_kernel, H=H, W=W, N=N, Cp=cin_pad)

    flops = 2 * (C1 * K1 + C2 * K2) * L
    bytes_accessed = 4 * (mask.size + x_flat.size + w1k.size + b1k.size
                          + w2k.size + b2k.size + N * C1 * HW + N * C2 * HW)

    o1, o2 = pl.pallas_call(
        kernel,
        out_shape=(jax.ShapeDtypeStruct((N, C1, HW), jnp.float32),
                   jax.ShapeDtypeStruct((N, C2, HW), jnp.float32)),
        grid_spec=pltpu.PrefetchScalarGridSpec(
            num_scalar_prefetch=0,
            grid=(1,),                                       # single step: whole batch
            in_specs=[
                pl.BlockSpec((9, L), lambda i: (0, 0)),
                pl.BlockSpec((N, Cin, HW), lambda i: (0, 0, 0)),
                pl.BlockSpec((C1, K1), lambda i: (0, 0)),
                pl.BlockSpec((C1, 1), lambda i: (0, 0)),
                pl.BlockSpec((C2, K2), lambda i: (0, 0)),
                pl.BlockSpec((C2, 1), lambda i: (0, 0)),
            ],
            out_specs=(
                pl.BlockSpec((N, C1, HW), lambda i: (0, 0, 0)),
                pl.BlockSpec((N, C2, HW), lambda i: (0, 0, 0)),
            ),
            scratch_shapes=[pltpu.VMEM((K2, L), jnp.float32)],
        ),
        compiler_params=pltpu.CompilerParams(
            dimension_semantics=("arbitrary",)),
        cost_estimate=pl.CostEstimate(flops=flops, transcendentals=0,
                                      bytes_accessed=bytes_accessed),
    )(mask, x_flat, w1k, b1k, w2k, b2k)

    # Free reshapes back to NCHW (outputs are already in N, C, H*W order).
    return o1.reshape(N, C1, H, W), o2.reshape(N, C2, H, W)


def init_params(key):
    """Deterministic params in nn.Conv2d (OIHW) layout."""
    k1, k2, k3, k4 = jax.random.split(key, 4)
    w1 = jax.random.normal(k1, (16, 3, 3, 3), jnp.float32) * 0.1
    b1 = jax.random.normal(k2, (16,), jnp.float32) * 0.1
    w2 = jax.random.normal(k3, (32, 16, 3, 3), jnp.float32) * 0.1
    b2 = jax.random.normal(k4, (32,), jnp.float32) * 0.1
    return dict(w1=w1, b1=b1, w2=w2, b2=b2)


@jax.jit
def my_model_forward(x_nchw, packed):
    return fused_double_conv_relu(x_nchw, packed["w1k"], packed["b1k"],
                                  packed["w2k"], packed["b2k"])


def _reference_forward(x_nchw, params):
    """Pure-JAX reference (lax conv) for a correctness cross-check."""
    def conv(x, w, b):
        y = lax.conv_general_dilated(
            x, w, window_strides=(1, 1), padding=((1, 1), (1, 1)),
            dimension_numbers=("NCHW", "OIHW", "NCHW"))
        return jnp.maximum(y + b[None, :, None, None], 0.0)

    c1 = conv(x_nchw, params["w1"], params["b1"])
    c2 = conv(c1, params["w2"], params["b2"])
    return c1, c2


if __name__ == "__main__":
    key = jax.random.PRNGKey(0)
    kx, kp = jax.random.split(key)

    # NCHW input with 3 channels, as the module implies.
    x = jax.random.normal(kx, (2, 3, 16, 16), jnp.float32)
    params = init_params(kp)
    packed = prepack_params(params)          # one-time weight packing, outside the jit

    conv1_out, conv2_out = my_model_forward(x, packed)
    jax.block_until_ready((conv1_out, conv2_out))

    ref1, ref2 = _reference_forward(x, params)
    assert conv1_out.shape == (2, 16, 16, 16) and conv2_out.shape == (2, 32, 16, 16)
    assert jnp.allclose(conv1_out, ref1, atol=1e-4, rtol=1e-4)
    assert jnp.allclose(conv2_out, ref2, atol=1e-4, rtol=1e-4)

    print("KERNEL_OK")
</pallas_src>

<mosaic_0001>
module attributes {stable_mosaic.version = 11 : i64} {
  func.func @_fused_conv_kernel(%arg0: i32, %arg1: memref<9x512xf32, #tpu.memory_space<vmem>>, %arg2: memref<2x3x256xf32, #tpu.memory_space<vmem>>, %arg3: memref<16x72xf32, #tpu.memory_space<vmem>>, %arg4: memref<16x1xf32, #tpu.memory_space<vmem>>, %arg5: memref<32x144xf32, #tpu.memory_space<vmem>>, %arg6: memref<32x1xf32, #tpu.memory_space<vmem>>, %arg7: memref<2x16x256xf32, #tpu.memory_space<vmem>>, %arg8: memref<2x32x256xf32, #tpu.memory_space<vmem>>, %arg9: memref<144x512xf32, #tpu.memory_space<vmem>>) attributes {dimension_semantics = [#tpu.dimension_semantics<arbitrary>], iteration_bounds = array<i64: 1>, scalar_prefetch = 0 : i64, scratch_operands = 1 : i64, tpu.core_type = #tpu.core_type<tc>, window_params = [{pipeline_mode = #tpu.pipeline_mode<synchronous>, transform_indices = @transform_0, window_bounds = array<i64: 9, 512>}, {pipeline_mode = #tpu.pipeline_mode<synchronous>, transform_indices = @transform_1, window_bounds = array<i64: 2, 3, 256>}, {pipeline_mode = #tpu.pipeline_mode<synchronous>, transform_indices = @transform_2, window_bounds = array<i64: 16, 72>}, {pipeline_mode = #tpu.pipeline_mode<synchronous>, transform_indices = @transform_3, window_bounds = array<i64: 16, 1>}, {pipeline_mode = #tpu.pipeline_mode<synchronous>, transform_indices = @transform_4, window_bounds = array<i64: 32, 144>}, {pipeline_mode = #tpu.pipeline_mode<synchronous>, transform_indices = @transform_5, window_bounds = array<i64: 32, 1>}, {pipeline_mode = #tpu.pipeline_mode<synchronous>, transform_indices = @transform_6, window_bounds = array<i64: 2, 16, 256>}, {pipeline_mode = #tpu.pipeline_mode<synchronous>, transform_indices = @transform_7, window_bounds = array<i64: 2, 32, 256>}]} {
    %c0 = arith.constant 0 : index
    %c0_0 = arith.constant 0 : index
    %c0_1 = arith.constant 0 : index
    %0 = vector.load %arg2[%c0, %c0_0, %c0_1] : memref<2x3x256xf32, #tpu.memory_space<vmem>>, vector<1x3x256xf32>
    %1 = vector.shape_cast %0 : vector<1x3x256xf32> to vector<3x256xf32>
    %c1 = arith.constant 1 : index
    %c0_2 = arith.constant 0 : index
    %c0_3 = arith.constant 0 : index
    %2 = vector.load %arg2[%c1, %c0_2, %c0_3] : memref<2x3x256xf32, #tpu.memory_space<vmem>>, vector<1x3x256xf32>
    %3 = vector.shape_cast %2 : vector<1x3x256xf32> to vector<3x256xf32>
    %4 = tpu.concatenate %1, %3 in 1 : vector<3x256xf32>, vector<3x256xf32> -> vector<3x512xf32>
    %c0_i32 = arith.constant 0 : i32
    %5 = arith.sitofp %c0_i32 : i32 to f32
    %6 = vector.broadcast %5 : f32 to vector<5x512xf32>
    %7 = tpu.concatenate %4, %6 in 0 : vector<3x512xf32>, vector<5x512xf32> -> vector<8x512xf32>
    %c17_i32 = arith.constant 17 : i32
    %8 = tpu.dynamic_rotate %7 by %c17_i32 dim 1 : vector<8x512xf32>, i32 -> vector<8x512xf32>
    %c0_4 = arith.constant 0 : index
    %c0_5 = arith.constant 0 : index
    %9 = vector.load %arg1[%c0_4, %c0_5] : memref<9x512xf32, #tpu.memory_space<vmem>>, vector<1x512xf32>
    %10 = vector.broadcast %9 : vector<1x512xf32> to vector<8x512xf32>
    %11 = arith.mulf %8, %10 : vector<8x512xf32>
    %c16_i32 = arith.constant 16 : i32
    %12 = tpu.dynamic_rotate %7 by %c16_i32 dim 1 : vector<8x512xf32>, i32 -> vector<8x512xf32>
    %c1_6 = arith.constant 1 : index
    %c0_7 = arith.constant 0 : index
    %13 = vector.load %arg1[%c1_6, %c0_7] : memref<9x512xf32, #tpu.memory_space<vmem>>, vector<1x512xf32>
    %14 = vector.broadcast %13 : vector<1x512xf32> to vector<8x512xf32>
    %15 = arith.mulf %12, %14 : vector<8x512xf32>
    %c15_i32 = arith.constant 15 : i32
    %16 = tpu.dynamic_rotate %7 by %c15_i32 dim 1 : vector<8x512xf32>, i32 -> vector<8x512xf32>
    %c2 = arith.constant 2 : index
    %c0_8 = arith.constant 0 : index
    %17 = vector.load %arg1[%c2, %c0_8] : memref<9x512xf32, #tpu.memory_space<vmem>>, vector<1x512xf32>
    %18 = vector.broadcast %17 : vector<1x512xf32> to vector<8x512xf32>
    %19 = arith.mulf %16, %18 : vector<8x512xf32>
    %c1_i32 = arith.constant 1 : i32
    %20 = tpu.dynamic_rotate %7 by %c1_i32 dim 1 : vector<8x512xf32>, i32 -> vector<8x512xf32>
    %c3 = arith.constant 3 : index
    %c0_9 = arith.constant 0 : index
    %21 = vector.load %arg1[%c3, %c0_9] : memref<9x512xf32, #tpu.memory_space<vmem>>, vector<1x512xf32>
    %22 = vector.broadcast %21 : vector<1x512xf32> to vector<8x512xf32>
    %23 = arith.mulf %20, %22 : vector<8x512xf32>
    %c511_i32 = arith.constant 511 : i32
    %24 = tpu.dynamic_rotate %7 by %c511_i32 dim 1 : vector<8x512xf32>, i32 -> vector<8x512xf32>
    %c5 = arith.constant 5 : index
    %c0_10 = arith.constant 0 : index
    %25 = vector.load %arg1[%c5, %c0_10] : memref<9x512xf32, #tpu.memory_space<vmem>>, vector<1x512xf32>
    %26 = vector.broadcast %25 : vector<1x512xf32> to vector<8x512xf32>
    %27 = arith.mulf %24, %26 : vector<8x512xf32>
    %c497_i32 = arith.constant 497 : i32
    %28 = tpu.dynamic_rotate %7 by %c497_i32 dim 1 : vector<8x512xf32>, i32 -> vector<8x512xf32>
    %c6 = arith.constant 6 : index
    %c0_11 = arith.constant 0 : index
    %29 = vector.load %arg1[%c6, %c0_11] : memref<9x512xf32, #tpu.memory_space<vmem>>, vector<1x512xf32>
    %30 = vector.broadcast %29 : vector<1x512xf32> to vector<8x512xf32>
    %31 = arith.mulf %28, %30 : vector<8x512xf32>
    %c496_i32 = arith.constant 496 : i32
    %32 = tpu.dynamic_rotate %7 by %c496_i32 dim 1 : vector<8x512xf32>, i32 -> vector<8x512xf32>
    %c7 = arith.constant 7 : index
    %c0_12 = arith.constant 0 : index
    %33 = vector.load %arg1[%c7, %c0_12] : memref<9x512xf32, #tpu.memory_space<vmem>>, vector<1x512xf32>
    %34 = vector.broadcast %33 : vector<1x512xf32> to vector<8x512xf32>
    %35 = arith.mulf %32, %34 : vector<8x512xf32>
    %c495_i32 = arith.constant 495 : i32
    %36 = tpu.dynamic_rotate %7 by %c495_i32 dim 1 : vector<8x512xf32>, i32 -> vector<8x512xf32>
    %c8 = arith.constant 8 : index
    %c0_13 = arith.constant 0 : index
    %37 = vector.load %arg1[%c8, %c0_13] : memref<9x512xf32, #tpu.memory_space<vmem>>, vector<1x512xf32>
    %38 = vector.broadcast %37 : vector<1x512xf32> to vector<8x512xf32>
    %39 = arith.mulf %36, %38 : vector<8x512xf32>
    %40 = tpu.concatenate %11, %15, %19, %23, %7, %27, %31, %35, %39 in 0 : vector<8x512xf32>, vector<8x512xf32>, vector<8x512xf32>, vector<8x512xf32>, vector<8x512xf32>, vector<8x512xf32>, vector<8x512xf32>, vector<8x512xf32>, vector<8x512xf32> -> vector<72x512xf32>
    %c0_14 = arith.constant 0 : index
    %c0_15 = arith.constant 0 : index
    %41 = vector.load %arg3[%c0_14, %c0_15] : memref<16x72xf32, #tpu.memory_space<vmem>>, vector<16x72xf32>
    %cst = arith.constant dense<0.000000e+00> : vector<16x512xf32>
    %42 = tpu.matmul %41, %40, %cst {dimension_numbers = #tpu.dot_dimension_numbers<[1], [0], [0], [1], [0, 0, 1, 1], [], []>} : vector<16x72xf32>, vector<72x512xf32>, vector<16x512xf32> -> vector<16x512xf32>
    %c0_16 = arith.constant 0 : index
    %c0_17 = arith.constant 0 : index
    %43 = vector.load %arg4[%c0_16, %c0_17] : memref<16x1xf32, #tpu.memory_space<vmem>>, vector<16x1xf32>
    %44 = vector.broadcast %43 : vector<16x1xf32> to vector<16x512xf32>
    %45 = arith.addf %42, %44 : vector<16x512xf32>
    %cst_18 = arith.constant 0.000000e+00 : f32
    %46 = vector.broadcast %cst_18 : f32 to vector<16x512xf32>
    %47 = arith.maximumf %45, %46 : vector<16x512xf32>
    %c17_i32_19 = arith.constant 17 : i32
    %48 = tpu.dynamic_rotate %47 by %c17_i32_19 dim 1 : vector<16x512xf32>, i32 -> vector<16x512xf32>
    %c0_20 = arith.constant 0 : index
    %c0_21 = arith.constant 0 : index
    %49 = vector.load %arg1[%c0_20, %c0_21] : memref<9x512xf32, #tpu.memory_space<vmem>>, vector<1x512xf32>
    %50 = vector.broadcast %49 : vector<1x512xf32> to vector<16x512xf32>
    %51 = arith.mulf %48, %50 : vector<16x512xf32>
    %c0_22 = arith.constant 0 : index
    %c0_23 = arith.constant 0 : index
    %52 = vector.load %arg9[%c0_22, %c0_23] : memref<144x512xf32, #tpu.memory_space<vmem>>, vector<16x512xf32>
    tpu.vector_store %arg9[%c0_22, %c0_23], %51 {strides = array<i32>} : memref<144x512xf32, #tpu.memory_space<vmem>>, vector<16x512xf32>,
    %c16_i32_24 = arith.constant 16 : i32
    %53 = tpu.dynamic_rotate %47 by %c16_i32_24 dim 1 : vector<16x512xf32>, i32 -> vector<16x512xf32>
    %c1_25 = arith.constant 1 : index
    %c0_26 = arith.constant 0 : index
    %54 = vector.load %arg1[%c1_25, %c0_26] : memref<9x512xf32, #tpu.memory_space<vmem>>, vector<1x512xf32>
    %55 = vector.broadcast %54 : vector<1x512xf32> to vector<16x512xf32>
    %56 = arith.mulf %53, %55 : vector<16x512xf32>
    %c16 = arith.constant 16 : index
    %c0_27 = arith.constant 0 : index
    %57 = vector.load %arg9[%c16, %c0_27] : memref<144x512xf32, #tpu.memory_space<vmem>>, vector<16x512xf32>
    tpu.vector_store %arg9[%c16, %c0_27], %56 {strides = array<i32>} : memref<144x512xf32, #tpu.memory_space<vmem>>, vector<16x512xf32>,
    %c15_i32_28 = arith.constant 15 : i32
    %58 = tpu.dynamic_rotate %47 by %c15_i32_28 dim 1 : vector<16x512xf32>, i32 -> vector<16x512xf32>
    %c2_29 = arith.constant 2 : index
    %c0_30 = arith.constant 0 : index
    %59 = vector.load %arg1[%c2_29, %c0_30] : memref<9x512xf32, #tpu.memory_space<vmem>>, vector<1x512xf32>
    %60 = vector.broadcast %59 : vector<1x512xf32> to vector<16x512xf32>
    %61 = arith.mulf %58, %60 : vector<16x512xf32>
    %c32 = arith.constant 32 : index
    %c0_31 = arith.constant 0 : index
    %62 = vector.load %arg9[%c32, %c0_31] : memref<144x512xf32, #tpu.memory_space<vmem>>, vector<16x512xf32>
    tpu.vector_store %arg9[%c32, %c0_31], %61 {strides = array<i32>} : memref<144x512xf32, #tpu.memory_space<vmem>>, vector<16x512xf32>,
    %c1_i32_32 = arith.constant 1 : i32
    %63 = tpu.dynamic_rotate %47 by %c1_i32_32 dim 1 : vector<16x512xf32>, i32 -> vector<16x512xf32>
    %c3_33 = arith.constant 3 : index
    %c0_34 = arith.constant 0 : index
    %64 = vector.load %arg1[%c3_33, %c0_34] : memref<9x512xf32, #tpu.memory_space<vmem>>, vector<1x512xf32>
    %65 = vector.broadcast %64 : vector<1x512xf32> to vector<16x512xf32>
    %66 = arith.mulf %63, %65 : vector<16x512xf32>
    %c48 = arith.constant 48 : index
    %c0_35 = arith.constant 0 : index
    %67 = vector.load %arg9[%c48, %c0_35] : memref<144x512xf32, #tpu.memory_space<vmem>>, vector<16x512xf32>
    tpu.vector_store %arg9[%c48, %c0_35], %66 {strides = array<i32>} : memref<144x512xf32, #tpu.memory_space<vmem>>, vector<16x512xf32>,
    %c64 = arith.constant 64 : index
    %c0_36 = arith.constant 0 : index
    %68 = vector.load %arg9[%c64, %c0_36] : memref<144x512xf32, #tpu.memory_space<vmem>>, vector<16x512xf32>
    tpu.vector_store %arg9[%c64, %c0_36], %47 {strides = array<i32>} : memref<144x512xf32, #tpu.memory_space<vmem>>, vector<16x512xf32>,
    %c511_i32_37 = arith.constant 511 : i32
    %69 = tpu.dynamic_rotate %47 by %c511_i32_37 dim 1 : vector<16x512xf32>, i32 -> vector<16x512xf32>
    %c5_38 = arith.constant 5 : index
    %c0_39 = arith.constant 0 : index
    %70 = vector.load %arg1[%c5_38, %c0_39] : memref<9x512xf32, #tpu.memory_space<vmem>>, vector<1x512xf32>
    %71 = vector.broadcast %70 : vector<1x512xf32> to vector<16x512xf32>
    %72 = arith.mulf %69, %71 : vector<16x512xf32>
    %c80 = arith.constant 80 : index
    %c0_40 = arith.constant 0 : index
    %73 = vector.load %arg9[%c80, %c0_40] : memref<144x512xf32, #tpu.memory_space<vmem>>, vector<16x512xf32>
    tpu.vector_store %arg9[%c80, %c0_40], %72 {strides = array<i32>} : memref<144x512xf32, #tpu.memory_space<vmem>>, vector<16x512xf32>,
    %c497_i32_41 = arith.constant 497 : i32
    %74 = tpu.dynamic_rotate %47 by %c497_i32_41 dim 1 : vector<16x512xf32>, i32 -> vector<16x512xf32>
    %c6_42 = arith.constant 6 : index
    %c0_43 = arith.constant 0 : index
    %75 = vector.load %arg1[%c6_42, %c0_43] : memref<9x512xf32, #tpu.memory_space<vmem>>, vector<1x512xf32>
    %76 = vector.broadcast %75 : vector<1x512xf32> to vector<16x512xf32>
    %77 = arith.mulf %74, %76 : vector<16x512xf32>
    %c96 = arith.constant 96 : index
    %c0_44 = arith.constant 0 : index
    %78 = vector.load %arg9[%c96, %c0_44] : memref<144x512xf32, #tpu.memory_space<vmem>>, vector<16x512xf32>
    tpu.vector_store %arg9[%c96, %c0_44], %77 {strides = array<i32>} : memref<144x512xf32, #tpu.memory_space<vmem>>, vector<16x512xf32>,
    %c496_i32_45 = arith.constant 496 : i32
    %79 = tpu.dynamic_rotate %47 by %c496_i32_45 dim 1 : vector<16x512xf32>, i32 -> vector<16x512xf32>
    %c7_46 = arith.constant 7 : index
    %c0_47 = arith.constant 0 : index
    %80 = vector.load %arg1[%c7_46, %c0_47] : memref<9x512xf32, #tpu.memory_space<vmem>>, vector<1x512xf32>
    %81 = vector.broadcast %80 : vector<1x512xf32> to vector<16x512xf32>
    %82 = arith.mulf %79, %81 : vector<16x512xf32>
    %c112 = arith.constant 112 : index
    %c0_48 = arith.constant 0 : index
    %83 = vector.load %arg9[%c112, %c0_48] : memref<144x512xf32, #tpu.memory_space<vmem>>, vector<16x512xf32>
    tpu.vector_store %arg9[%c112, %c0_48], %82 {strides = array<i32>} : memref<144x512xf32, #tpu.memory_space<vmem>>, vector<16x512xf32>,
    %c495_i32_49 = arith.constant 495 : i32
    %84 = tpu.dynamic_rotate %47 by %c495_i32_49 dim 1 : vector<16x512xf32>, i32 -> vector<16x512xf32>
    %c8_50 = arith.constant 8 : index
    %c0_51 = arith.constant 0 : index
    %85 = vector.load %arg1[%c8_50, %c0_51] : memref<9x512xf32, #tpu.memory_space<vmem>>, vector<1x512xf32>
    %86 = vector.broadcast %85 : vector<1x512xf32> to vector<16x512xf32>
    %87 = arith.mulf %84, %86 : vector<16x512xf32>
    %c128 = arith.constant 128 : index
    %c0_52 = arith.constant 0 : index
    %88 = vector.load %arg9[%c128, %c0_52] : memref<144x512xf32, #tpu.memory_space<vmem>>, vector<16x512xf32>
    tpu.vector_store %arg9[%c128, %c0_52], %87 {strides = array<i32>} : memref<144x512xf32, #tpu.memory_space<vmem>>, vector<16x512xf32>,
    %c0_53 = arith.constant 0 : index
    %c0_54 = arith.constant 0 : index
    %89 = vector.load %arg5[%c0_53, %c0_54] : memref<32x144xf32, #tpu.memory_space<vmem>>, vector<32x144xf32>
    %c0_55 = arith.constant 0 : index
    %c0_56 = arith.constant 0 : index
    %90 = vector.load %arg9[%c0_55, %c0_56] : memref<144x512xf32, #tpu.memory_space<vmem>>, vector<144x512xf32>
    %cst_57 = arith.constant dense<0.000000e+00> : vector<32x512xf32>
    %91 = tpu.matmul %89, %90, %cst_57 {dimension_numbers = #tpu.dot_dimension_numbers<[1], [0], [0], [1], [0, 0, 1, 1], [], []>} : vector<32x144xf32>, vector<144x512xf32>, vector<32x512xf32> -> vector<32x512xf32>
    %c0_58 = arith.constant 0 : index
    %c0_59 = arith.constant 0 : index
    %92 = vector.load %arg6[%c0_58, %c0_59] : memref<32x1xf32, #tpu.memory_space<vmem>>, vector<32x1xf32>
    %93 = vector.broadcast %92 : vector<32x1xf32> to vector<32x512xf32>
    %94 = arith.addf %91, %93 : vector<32x512xf32>
    %cst_60 = arith.constant 0.000000e+00 : f32
    %95 = vector.broadcast %cst_60 : f32 to vector<32x512xf32>
    %96 = arith.maximumf %94, %95 : vector<32x512xf32>
    %97 = vector.extract_strided_slice %47 {offsets = [0, 0], sizes = [16, 256], strides = [1, 1]} : vector<16x512xf32> to vector<16x256xf32>
    %c0_61 = arith.constant 0 : index
    %c0_62 = arith.constant 0 : index
    %c0_63 = arith.constant 0 : index
    %98 = vector.load %arg7[%c0_61, %c0_62, %c0_63] : memref<2x16x256xf32, #tpu.memory_space<vmem>>, vector<1x16x256xf32>
    %99 = vector.shape_cast %98 : vector<1x16x256xf32> to vector<16x256xf32>
    %100 = vector.shape_cast %97 : vector<16x256xf32> to vector<1x16x256xf32>
    tpu.vector_store %arg7[%c0_61, %c0_62, %c0_63], %100 {strides = array<i32>} : memref<2x16x256xf32, #tpu.memory_space<vmem>>, vector<1x16x256xf32>,
    %101 = vector.extract_strided_slice %96 {offsets = [0, 0], sizes = [32, 256], strides = [1, 1]} : vector<32x512xf32> to vector<32x256xf32>
    %c0_64 = arith.constant 0 : index
    %c0_65 = arith.constant 0 : index
    %c0_66 = arith.constant 0 : index
    %102 = vector.load %arg8[%c0_64, %c0_65, %c0_66] : memref<2x32x256xf32, #tpu.memory_space<vmem>>, vector<1x32x256xf32>
    %103 = vector.shape_cast %102 : vector<1x32x256xf32> to vector<32x256xf32>
    %104 = vector.shape_cast %101 : vector<32x256xf32> to vector<1x32x256xf32>
    tpu.vector_store %arg8[%c0_64, %c0_65, %c0_66], %104 {strides = array<i32>} : memref<2x32x256xf32, #tpu.memory_space<vmem>>, vector<1x32x256xf32>,
    %105 = vector.extract_strided_slice %47 {offsets = [0, 256], sizes = [16, 256], strides = [1, 1]} : vector<16x512xf32> to vector<16x256xf32>
    %c1_67 = arith.constant 1 : index
    %c0_68 = arith.constant 0 : index
    %c0_69 = arith.constant 0 : index
    %106 = vector.load %arg7[%c1_67, %c0_68, %c0_69] : memref<2x16x256xf32, #tpu.memory_space<vmem>>, vector<1x16x256xf32>
    %107 = vector.shape_cast %106 : vector<1x16x256xf32> to vector<16x256xf32>
    %108 = vector.shape_cast %105 : vector<16x256xf32> to vector<1x16x256xf32>
    tpu.vector_store %arg7[%c1_67, %c0_68, %c0_69], %108 {strides = array<i32>} : memref<2x16x256xf32, #tpu.memory_space<vmem>>, vector<1x16x256xf32>,
    %109 = vector.extract_strided_slice %96 {offsets = [0, 256], sizes = [32, 256], strides = [1, 1]} : vector<32x512xf32> to vector<32x256xf32>
    %c1_70 = arith.constant 1 : index
    %c0_71 = arith.constant 0 : index
    %c0_72 = arith.constant 0 : index
    %110 = vector.load %arg8[%c1_70, %c0_71, %c0_72] : memref<2x32x256xf32, #tpu.memory_space<vmem>>, vector<1x32x256xf32>
    %111 = vector.shape_cast %110 : vector<1x32x256xf32> to vector<32x256xf32>
    %112 = vector.shape_cast %109 : vector<32x256xf32> to vector<1x32x256xf32>
    tpu.vector_store %arg8[%c1_70, %c0_71, %c0_72], %112 {strides = array<i32>} : memref<2x32x256xf32, #tpu.memory_space<vmem>>, vector<1x32x256xf32>,
    return
  }
  func.func @transform_0(%arg0: i32) -> (i32, i32) {
    %c0_i32 = arith.constant 0 : i32
    %c0_i32_0 = arith.constant 0 : i32
    %c0_i32_1 = arith.constant 0 : i32
    return %c0_i32, %c0_i32_0 : i32, i32
  }
  func.func @transform_1(%arg0: i32) -> (i32, i32, i32) {
    %c0_i32 = arith.constant 0 : i32
    %c0_i32_0 = arith.constant 0 : i32
    %c0_i32_1 = arith.constant 0 : i32
    %c0_i32_2 = arith.constant 0 : i32
    return %c0_i32, %c0_i32_0, %c0_i32_1 : i32, i32, i32
  }
  func.func @transform_2(%arg0: i32) -> (i32, i32) {
    %c0_i32 = arith.constant 0 : i32
    %c0_i32_0 = arith.constant 0 : i32
    %c0_i32_1 = arith.constant 0 : i32
    return %c0_i32, %c0_i32_0 : i32, i32
  }
  func.func @transform_3(%arg0: i32) -> (i32, i32) {
    %c0_i32 = arith.constant 0 : i32
    %c0_i32_0 = arith.constant 0 : i32
    %c0_i32_1 = arith.constant 0 : i32
    return %c0_i32, %c0_i32_0 : i32, i32
  }
  func.func @transform_4(%arg0: i32) -> (i32, i32) {
    %c0_i32 = arith.constant 0 : i32
    %c0_i32_0 = arith.constant 0 : i32
    %c0_i32_1 = arith.constant 0 : i32
    return %c0_i32, %c0_i32_0 : i32, i32
  }
  func.func @transform_5(%arg0: i32) -> (i32, i32) {
    %c0_i32 = arith.constant 0 : i32
    %c0_i32_0 = arith.constant 0 : i32
    %c0_i32_1 = arith.constant 0 : i32
    return %c0_i32, %c0_i32_0 : i32, i32
  }
  func.func @transform_6(%arg0: i32) -> (i32, i32, i32) {
    %c0_i32 = arith.constant 0 : i32
    %c0_i32_0 = arith.constant 0 : i32
    %c0_i32_1 = arith.constant 0 : i32
    %c0_i32_2 = arith.constant 0 : i32
    return %c0_i32, %c0_i32_0, %c0_i32_1 : i32, i32, i32
  }
  func.func @transform_7(%arg0: i32) -> (i32, i32, i32) {
    %c0_i32 = arith.constant 0 : i32
    %c0_i32_0 = arith.constant 0 : i32
    %c0_i32_1 = arith.constant 0 : i32
    %c0_i32_2 = arith.constant 0 : i32
    return %c0_i32, %c0_i32_0, %c0_i32_1 : i32, i32, i32
  }
}

</mosaic_0001>

<llo_original>
// kernel: my_model_forward.1
$region0: #{my_model_forward.1}
  #allocation0 [shape = 'u32[]', space=smem, size = 0x4, offset = 0x4, fixed_abs, tag = 'smem constant byte address 0x4 - core index']
  #allocation1 [shape = 'u32[144,128]{1,0:T(1,128)}', space=vmem, size = 0x12000, scoped, tag = 'internal scratch']
  #allocation2 [shape = 'f32[144,512]{1,0:T(8,128)}', space=vmem, size = 0x48000, scoped, tag = 'scratch operand']
  %s0 = inlined_call_operand.vmem [shape: f32[9,512], index: 0, kind: input, shape index: {}]
  %s1 = inlined_call_operand.vmem [shape: f32[2,3,256], index: 1, kind: input, shape index: {}]
  %s2 = inlined_call_operand.vmem [shape: f32[16,72], index: 2, kind: input, shape index: {}]
  %s3 = inlined_call_operand.vmem [shape: f32[16,1], index: 3, kind: input, shape index: {}]
  %s4 = inlined_call_operand.vmem [shape: f32[32,144], index: 4, kind: input, shape index: {}]
  %s5 = inlined_call_operand.vmem [shape: f32[32,1], index: 5, kind: input, shape index: {}]
  %s6 = inlined_call_operand.vmem [shape: f32[2,16,256], index: 6, kind: output, shape index: {0}]
  %s7 = inlined_call_operand.vmem [shape: f32[2,32,256], index: 7, kind: output, shape index: {1}]
  %8 = xla_tuple %s6, %s7
  %s9 = sld [smem:[#allocation0]]
  $region42: #{my_model_forward.1} parent=0
    _
  %s11 = ssub.s32 1, %s9
  %s12 = scalar_select 0, %s11, %s9
  // Predicated region
  $region2: #{my_model_forward.1} parent=0 // pred_check
    _
  $region3: #{my_model_forward.1} parent=0 // pred_check_branch
    %14 = sbr.rel (0) target = $region5
  $region4: #{my_model_forward.1} parent=0 // pred_region
    _
  $region5: #{my_model_forward.1} parent=0 // pred_fallthru
    _
  // Predicated region
  $region6: #{my_model_forward.1} parent=0 // pred_check
    _
  $region7: #{my_model_forward.1} parent=0 // pred_check_branch
    %16 = sbr.rel (0) target = $region9
  $region8: #{my_model_forward.1} parent=0 // pred_region
    _
  $region9: #{my_model_forward.1} parent=0 // pred_fallthru
    _
  // Predicated region
  $region10: #{my_model_forward.1} parent=0 // pred_check
    _
  $region11: #{my_model_forward.1} parent=0 // pred_check_branch
    %18 = sbr.rel (0) target = $region13
  $region12: #{my_model_forward.1} parent=0 // pred_region
    _
  $region13: #{my_model_forward.1} parent=0 // pred_fallthru
    _
  // Predicated region
  $region14: #{my_model_forward.1} parent=0 // pred_check
    _
  $region15: #{my_model_forward.1} parent=0 // pred_check_branch
    %20 = sbr.rel (0) target = $region17
  $region16: #{my_model_forward.1} parent=0 // pred_region
    _
  $region17: #{my_model_forward.1} parent=0 // pred_fallthru
    _
  // Predicated region
  $region18: #{my_model_forward.1} parent=0 // pred_check
    _
  $region19: #{my_model_forward.1} parent=0 // pred_check_branch
    %22 = sbr.rel (0) target = $region21
  $region20: #{my_model_forward.1} parent=0 // pred_region
    _
  $region21: #{my_model_forward.1} parent=0 // pred_fallthru
    _
  // Predicated region
  $region22: #{my_model_forward.1} parent=0 // pred_check
    _
  $region23: #{my_model_forward.1} parent=0 // pred_check_branch
    %24 = sbr.rel (0) target = $region25
  $region24: #{my_model_forward.1} parent=0 // pred_region
    _
  $region25: #{my_model_forward.1} parent=0 // pred_fallthru
    _
  %v25 = vld [vmem:[%s1] sm:$0x77]
  %s26 = scalar_lea.vmem %s1, 8
  %v27 = vld [vmem:[%s26] sm:$0x77]
  %v29 = vcombine.high %v25, %v25
  %v32 = vcombine.high %v27, %v27
  %vm34 = vcmask 1042432
  %v35 = vsel %vm34, %v25, 0.0
  %v36 = vsel %vm34, %v29, 0.0
  %v37 = vsel %vm34, %v27, 0.0
  %v38 = vsel %vm34, %v32, 0.0
  %39 = vrot.lane.b32.xlu0 %v35, 17
  %v40 = vpop.permute.xlu0 %39
  %41 = vrot.lane.b32.xlu0 %v36, 17
  %v42 = vpop.permute.xlu0 %41
  %43 = vrot.lane.b32.xlu0 %v37, 17
  %v44 = vpop.permute.xlu0 %43
  %45 = vrot.lane.b32.xlu0 %v38, 17
  %v46 = vpop.permute.xlu0 %45
  %v47 = vlaneseq
  %v48 = vand.u32 %v47, 127
  %vm49 = vcmp.lt.s32.totalorder %v48, 17
  %v50 = vsel %vm49, %v44, %v46
  %v51 = vsel %vm49, %v42, %v44
  %v52 = vsel %vm49, %v40, %v42
  %v53 = vsel %vm49, %v46, %v40
  %v54 = vld [vmem:[%s0] ss:$8 sm:$0xf]
  %v56 = vlaneseq
  %v57 = vshrl.u32 %v56, 7
  %v58 = vsub.s32 0, %v57
  %v59 = vrot.slane %v54, %v58
  %v60 = vlaneseq
  %v61 = vshrl.u32 %v60, 7
  %v62 = vsub.s32 1, %v61
  %v63 = vrot.slane %v54, %v62
  %v64 = vlaneseq
  %v65 = vshrl.u32 %v64, 7
  %v66 = vsub.s32 2, %v65
  %v67 = vrot.slane %v54, %v66
  %v68 = vlaneseq
  %v69 = vshrl.u32 %v68, 7
  %v70 = vsub.s32 3, %v69
  %v71 = vrot.slane %v54, %v70
  %v76 = vmul.f32 %v53, %v59
  %v77 = vmul.f32 %v52, %v63
  %v78 = vmul.f32 %v51, %v67
  %v79 = vmul.f32 %v50, %v71
  %80 = vrot.lane.b32.xlu0 %v35, 16
  %v81 = vpop.permute.xlu0 %80
  %82 = vrot.lane.b32.xlu0 %v36, 16
  %v83 = vpop.permute.xlu0 %82
  %84 = vrot.lane.b32.xlu0 %v37, 16
  %v85 = vpop.permute.xlu0 %84
  %86 = vrot.lane.b32.xlu0 %v38, 16
  %v87 = vpop.permute.xlu0 %86
  %vm88 = vcmp.lt.s32.totalorder %v48, 16
  %v89 = vsel %vm88, %v85, %v87
  %v90 = vsel %vm88, %v83, %v85
  %v91 = vsel %vm88, %v81, %v83
  %v92 = vsel %vm88, %v87, %v81
  %s93 = scalar_lea.vmem %s0, 1
  %v94 = vld [vmem:[%s93] ss:$8 sm:$0xf]
  %v96 = vlaneseq
  %v97 = vshrl.u32 %v96, 7
  %v98 = vsub.s32 0, %v97
  %v99 = vrot.slane %v94, %v98
  %v100 = vlaneseq
  %v101 = vshrl.u32 %v100, 7
  %v102 = vsub.s32 1, %v101
  %v103 = vrot.slane %v94, %v102
  %v104 = vlaneseq
  %v105 = vshrl.u32 %v104, 7
  %v106 = vsub.s32 2, %v105
  %v107 = vrot.slane %v94, %v106
  %v108 = vlaneseq
  %v109 = vshrl.u32 %v108, 7
  %v110 = vsub.s32 3, %v109
  %v111 = vrot.slane %v94, %v110
  %v116 = vmul.f32 %v92, %v99
  %v117 = vmul.f32 %v91, %v103
  %v118 = vmul.f32 %v90, %v107
  %v119 = vmul.f32 %v89, %v111
  %120 = vrot.lane.b32.xlu0 %v35, 15
  %v121 = vpop.permute.xlu0 %120
  %122 = vrot.lane.b32.xlu0 %v36, 15
  %v123 = vpop.permute.xlu0 %122
  %124 = vrot.lane.b32.xlu0 %v37, 15
  %v125 = vpop.permute.xlu0 %124
  %126 = vrot.lane.b32.xlu0 %v38, 15
  %v127 = vpop.permute.xlu0 %126
  %vm128 = vcmp.lt.s32.totalorder %v48, 15
  %v129 = vsel %vm128, %v125, %v127
  %v130 = vsel %vm128, %v123, %v125
  %v131 = vsel %vm128, %v121, %v123
  %v132 = vsel %vm128, %v127, %v121
  %s133 = scalar_lea.vmem %s0, 2
  %v134 = vld [vmem:[%s133] ss:$8 sm:$0xf]
  %v136 = vlaneseq
  %v137 = vshrl.u32 %v136, 7
  %v138 = vsub.s32 0, %v137
  %v139 = vrot.slane %v134, %v138
  %v140 = vlaneseq
  %v141 = vshrl.u32 %v140, 7
  %v142 = vsub.s32 1, %v141
  %v143 = vrot.slane %v134, %v142
  %v144 = vlaneseq
  %v145 = vshrl.u32 %v144, 7
  %v146 = vsub.s32 2, %v145
  %v147 = vrot.slane %v134, %v146
  %v148 = vlaneseq
  %v149 = vshrl.u32 %v148, 7
  %v150 = vsub.s32 3, %v149
  %v151 = vrot.slane %v134, %v150
  %v156 = vmul.f32 %v132, %v139
  %v157 = vmul.f32 %v131, %v143
  %v158 = vmul.f32 %v130, %v147
  %v159 = vmul.f32 %v129, %v151
  %160 = vrot.lane.b32.xlu0 %v35, 1
  %v161 = vpop.permute.xlu0 %160
  %162 = vrot.lane.b32.xlu0 %v36, 1
  %v163 = vpop.permute.xlu0 %162
  %164 = vrot.lane.b32.xlu0 %v37, 1
  %v165 = vpop.permute.xlu0 %164
  %166 = vrot.lane.b32.xlu0 %v38, 1
  %v167 = vpop.permute.xlu0 %166
  %vm168 = vcmp.lt.s32.totalorder %v48, 1
  %v169 = vsel %vm168, %v165, %v167
  %v170 = vsel %vm168, %v163, %v165
  %v171 = vsel %vm168, %v161, %v163
  %v172 = vsel %vm168, %v167, %v161
  %s173 = scalar_lea.vmem %s0, 3
  %v174 = vld [vmem:[%s173] ss:$8 sm:$0xf]
  %v176 = vlaneseq
  %v177 = vshrl.u32 %v176, 7
  %v178 = vsub.s32 0, %v177
  %v179 = vrot.slane %v174, %v178
  %v180 = vlaneseq
  %v181 = vshrl.u32 %v180, 7
  %v182 = vsub.s32 1, %v181
  %v183 = vrot.slane %v174, %v182
  %v184 = vlaneseq
  %v185 = vshrl.u32 %v184, 7
  %v186 = vsub.s32 2, %v185
  %v187 = vrot.slane %v174, %v186
  %v188 = vlaneseq
  %v189 = vshrl.u32 %v188, 7
  %v190 = vsub.s32 3, %v189
  %v191 = vrot.slane %v174, %v190
  %v196 = vmul.f32 %v172, %v179
  %v197 = vmul.f32 %v171, %v183
  %v198 = vmul.f32 %v170, %v187
  %v199 = vmul.f32 %v169, %v191
  %200 = vrot.lane.b32.xlu0 %v35, 127
  %v201 = vpop.permute.xlu0 %200
  %202 = vrot.lane.b32.xlu0 %v36, 127
  %v203 = vpop.permute.xlu0 %202
  %204 = vrot.lane.b32.xlu0 %v37, 127
  %v205 = vpop.permute.xlu0 %204
  %206 = vrot.lane.b32.xlu0 %v38, 127
  %v207 = vpop.permute.xlu0 %206
  %vm208 = vcmp.lt.s32.totalorder %v48, 127
  %v209 = vsel %vm208, %v205, %v207
  %v210 = vsel %vm208, %v203, %v205
  %v211 = vsel %vm208, %v201, %v203
  %v212 = vsel %vm208, %v207, %v201
  %s213 = scalar_lea.vmem %s0, 5
  %v214 = vld [vmem:[%s213] ss:$8 sm:$0xf]
  %v216 = vlaneseq
  %v217 = vshrl.u32 %v216, 7
  %v218 = vsub.s32 0, %v217
  %v219 = vrot.slane %v214, %v218
  %v220 = vlaneseq
  %v221 = vshrl.u32 %v220, 7
  %v222 = vsub.s32 1, %v221
  %v223 = vrot.slane %v214, %v222
  %v224 = vlaneseq
  %v225 = vshrl.u32 %v224, 7
  %v226 = vsub.s32 2, %v225
  %v227 = vrot.slane %v214, %v226
  %v228 = vlaneseq
  %v229 = vshrl.u32 %v228, 7
  %v230 = vsub.s32 3, %v229
  %v231 = vrot.slane %v214, %v230
  %v236 = vmul.f32 %v211, %v219
  %v237 = vmul.f32 %v210, %v223
  %v238 = vmul.f32 %v209, %v227
  %v239 = vmul.f32 %v212, %v231
  %240 = vrot.lane.b32.xlu0 %v35, 113
  %v241 = vpop.permute.xlu0 %240
  %242 = vrot.lane.b32.xlu0 %v36, 113
  %v243 = vpop.permute.xlu0 %242
  %244 = vrot.lane.b32.xlu0 %v37, 113
  %v245 = vpop.permute.xlu0 %244
  %246 = vrot.lane.b32.xlu0 %v38, 113
  %v247 = vpop.permute.xlu0 %246
  %vm248 = vcmp.lt.s32.totalorder %v48, 113
  %v249 = vsel %vm248, %v245, %v247
  %v250 = vsel %vm248, %v243, %v245
  %v251 = vsel %vm248, %v241, %v243
  %v252 = vsel %vm248, %v247, %v241
  %s253 = scalar_lea.vmem %s0, 6
  %v254 = vld [vmem:[%s253] ss:$8 sm:$0xf]
  %v256 = vlaneseq
  %v257 = vshrl.u32 %v256, 7
  %v258 = vsub.s32 0, %v257
  %v259 = vrot.slane %v254, %v258
  %v260 = vlaneseq
  %v261 = vshrl.u32 %v260, 7
  %v262 = vsub.s32 1, %v261
  %v263 = vrot.slane %v254, %v262
  %v264 = vlaneseq
  %v265 = vshrl.u32 %v264, 7
  %v266 = vsub.s32 2, %v265
  %v267 = vrot.slane %v254, %v266
  %v268 = vlaneseq
  %v269 = vshrl.u32 %v268, 7
  %v270 = vsub.s32 3, %v269
  %v271 = vrot.slane %v254, %v270
  %v276 = vmul.f32 %v251, %v259
  %v277 = vmul.f32 %v250, %v263
  %v278 = vmul.f32 %v249, %v267
  %v279 = vmul.f32 %v252, %v271
  %280 = vrot.lane.b32.xlu0 %v35, 112
  %v281 = vpop.permute.xlu0 %280
  %282 = vrot.lane.b32.xlu0 %v36, 112
  %v283 = vpop.permute.xlu0 %282
  %284 = vrot.lane.b32.xlu0 %v37, 112
  %v285 = vpop.permute.xlu0 %284
  %286 = vrot.lane.b32.xlu0 %v38, 112
  %v287 = vpop.permute.xlu0 %286
  %vm288 = vcmp.lt.s32.totalorder %v48, 112
  %v289 = vsel %vm288, %v285, %v287
  %v290 = vsel %vm288, %v283, %v285
  %v291 = vsel %vm288, %v281, %v283
  %v292 = vsel %vm288, %v287, %v281
  %s293 = scalar_lea.vmem %s0, 7
  %v294 = vld [vmem:[%s293] ss:$8 sm:$0xf]
  %v296 = vlaneseq
  %v297 = vshrl.u32 %v296, 7
  %v298 = vsub.s32 0, %v297
  %v299 = vrot.slane %v294, %v298
  %v300 = vlaneseq
  %v301 = vshrl.u32 %v300, 7
  %v302 = vsub.s32 1, %v301
  %v303 = vrot.slane %v294, %v302
  %v304 = vlaneseq
  %v305 = vshrl.u32 %v304, 7
  %v306 = vsub.s32 2, %v305
  %v307 = vrot.slane %v294, %v306
  %v308 = vlaneseq
  %v309 = vshrl.u32 %v308, 7
  %v310 = vsub.s32 3, %v309
  %v311 = vrot.slane %v294, %v310
  %v316 = vmul.f32 %v291, %v299
  %v317 = vmul.f32 %v290, %v303
  %v318 = vmul.f32 %v289, %v307
  %v319 = vmul.f32 %v292, %v311
  %320 = vrot.lane.b32.xlu0 %v35, 111
  %v321 = vpop.permute.xlu0 %320
  %322 = vrot.lane.b32.xlu0 %v36, 111
  %v323 = vpop.permute.xlu0 %322
  %324 = vrot.lane.b32.xlu0 %v37, 111
  %v325 = vpop.permute.xlu0 %324
  %326 = vrot.lane.b32.xlu0 %v38, 111
  %v327 = vpop.permute.xlu0 %326
  %vm328 = vcmp.lt.s32.totalorder %v48, 111
  %v329 = vsel %vm328, %v325, %v327
  %v330 = vsel %vm328, %v323, %v325
  %v331 = vsel %vm328, %v321, %v323
  %v332 = vsel %vm328, %v327, %v321
  %s333 = scalar_lea.vmem %s0, 32
  %v334 = vld [vmem:[%s333] ss:$8 sm:$0xf]
  %v336 = vlaneseq
  %v337 = vshrl.u32 %v336, 7
  %v338 = vsub.s32 0, %v337
  %v339 = vrot.slane %v334, %v338
  %v340 = vlaneseq
  %v341 = vshrl.u32 %v340, 7
  %v342 = vsub.s32 1, %v341
  %v343 = vrot.slane %v334, %v342
  %v344 = vlaneseq
  %v345 = vshrl.u32 %v344, 7
  %v346 = vsub.s32 2, %v345
  %v347 = vrot.slane %v334, %v346
  %v348 = vlaneseq
  %v349 = vshrl.u32 %v348, 7
  %v350 = vsub.s32 3, %v349
  %v351 = vrot.slane %v334, %v350
  %v356 = vmul.f32 %v331, %v339
  %v357 = vmul.f32 %v330, %v343
  %v358 = vmul.f32 %v329, %v347
  %v359 = vmul.f32 %v332, %v351
  %v360 = vld [vmem:[%s2] sm:$0xff]
  %v361 = vld [vmem:[%s2 + $0x8] sm:$0xff]
  %v362 = vld [vmem:[%s3] sm:$0xff]
  %v363 = vld [vmem:[%s3 + $0x8] sm:$0xff]
  %365 = vset.pattern.permute.xlu0 0
  %366 = vperm.xlu0 %365, %v362
  %v367 = vpop.permute.xlu0 %366
  %370 = vset.pattern.permute.xlu0 0
  %371 = vperm.xlu0 %370, %v363
  %v372 = vpop.permute.xlu0 %371
  %vm374 = vcmask 588800
  %v376 = vsel %vm374, %v360, 0
  %v379 = vsel %vm374, %v361, 0
  %381 = vmatprep.subr.mxu0 0.0
  %382 = vmatpush1.msra.mxu0 0.0
  %383 = vmatprep.subr.mxu0 0.0
  %384 = vmatpush1.msra.mxu0 0.0
  %385 = vmatprep.subr.mxu0 0.0
  %386 = vmatpush1.msra.mxu0 0.0
  %387 = vmatprep.subr.mxu0 0.0
  %388 = vmatpush1.msra.mxu0 0.0
  %389 = vmatprep.subr.mxu0 0.0
  %390 = vmatpush1.msra.mxu0 0.0
  %391 = vmatprep.subr.mxu0 0.0
  %392 = vmatpush1.msra.mxu0 0.0
  %393 = vmatprep.subr.mxu0 0.0
  %394 = vmatpush1.msra.mxu0 0.0
  %395 = vmatprep.subr.mxu0 %v357
  %396 = vmatpush1.msra.mxu0 %v356
  %397 = vmatprep.subr.mxu0 %v317
  %398 = vmatpush1.msra.mxu0 %v316
  %399 = vmatprep.subr.mxu0 %v277
  %400 = vmatpush1.msra.mxu0 %v276
  %401 = vmatprep.subr.mxu0 %v237
  %402 = vmatpush1.msra.mxu0 %v236
  %403 = vmatprep.subr.mxu0 %v36
  %404 = vmatpush1.msra.mxu0 %v35
  %405 = vmatprep.subr.mxu0 %v197
  %406 = vmatpush1.msra.mxu0 %v196
  %407 = vmatprep.subr.mxu0 %v157
  %408 = vmatpush1.msra.mxu0 %v156
  %409 = vmatprep.subr.mxu0 %v117
  %410 = vmatpush1.msra.mxu0 %v116
  %411 = vmatprep.subr.mxu0 %v77
  %412 = vmatpush1.msra.mxu0 %v76
  %413 = vmatprep.subr.mxu0 0.0
  %414 = vmatpush2.msra.mxu0 0.0
  %415 = vmatprep.subr.mxu0 0.0
  %416 = vmatpush2.msra.mxu0 0.0
  %417 = vmatprep.subr.mxu0 0.0
  %418 = vmatpush2.msra.mxu0 0.0
  %419 = vmatprep.subr.mxu0 0.0
  %420 = vmatpush2.msra.mxu0 0.0
  %421 = vmatprep.subr.mxu0 0.0
  %422 = vmatpush2.msra.mxu0 0.0
  %423 = vmatprep.subr.mxu0 0.0
  %424 = vmatpush2.msra.mxu0 0.0
  %425 = vmatprep.subr.mxu0 0.0
  %426 = vmatpush2.msra.mxu0 0.0
  %427 = vmatprep.subr.mxu0 0.0
  %428 = vmatpush2.msra.mxu0 0.0
  %429 = vmatprep.subr.mxu0 0.0
  %430 = vmatpush2.msra.mxu0 0.0
  %431 = vmatprep.subr.mxu0 0.0
  %432 = vmatpush2.msra.mxu0 0.0
  %433 = vmatprep.subr.mxu0 0.0
  %434 = vmatpush2.msra.mxu0 0.0
  %435 = vmatprep.subr.mxu0 0.0
  %436 = vmatpush2.msra.mxu0 0.0
  %437 = vmatprep.subr.mxu0 0.0
  %438 = vmatpush2.msra.mxu0 0.0
  %439 = vmatprep.subr.mxu0 0.0
  %440 = vmatpush2.msra.mxu0 0.0
  %441 = vmatprep.subr.mxu0 0.0
  %442 = vmatpush2.msra.mxu0 0.0
  %443 = vmatprep.subr.mxu0 0.0
  %444 = vmatpush2.msra.mxu0 0.0
  %445 = vmatprep.mubr.f32.mxu0 0.0
  %446 = vmatmul.mubr.f32.gmra.mxu0 %v376
  %v447 = vpop.f32.mrf.mxu0
  %v448 = vadd.f32 %v367, %v447
  %v449 = vpop.f32.mrf.mxu0
  %v450 = vadd.f32 %v367, %v449
  %451 = vmatprep.mubr.f32.mxu0 0.0
  %452 = vmatmul.mubr.f32.gmra.mxu0 %v379
  %v453 = vpop.f32.mrf.mxu0
  %v454 = vadd.f32 %v372, %v453
  %v455 = vpop.f32.mrf.mxu0
  %v456 = vadd.f32 %v372, %v455
  %457 = vdwg.mxu0
  %458 = vmatprep.subr.mxu0 0.0
  %459 = vmatpush1.msra.mxu0 0.0
  %460 = vmatprep.subr.mxu0 0.0
  %461 = vmatpush1.msra.mxu0 0.0
  %462 = vmatprep.subr.mxu0 0.0
  %463 = vmatpush1.msra.mxu0 0.0
  %464 = vmatprep.subr.mxu0 0.0
  %465 = vmatpush1.msra.mxu0 0.0
  %466 = vmatprep.subr.mxu0 0.0
  %467 = vmatpush1.msra.mxu0 0.0
  %468 = vmatprep.subr.mxu0 0.0
  %469 = vmatpush1.msra.mxu0 0.0
  %470 = vmatprep.subr.mxu0 0.0
  %471 = vmatpush1.msra.mxu0 0.0
  %472 = vmatprep.subr.mxu0 %v359
  %473 = vmatpush1.msra.mxu0 %v358
  %474 = vmatprep.subr.mxu0 %v319
  %475 = vmatpush1.msra.mxu0 %v318
  %476 = vmatprep.subr.mxu0 %v279
  %477 = vmatpush1.msra.mxu0 %v278
  %478 = vmatprep.subr.mxu0 %v239
  %479 = vmatpush1.msra.mxu0 %v238
  %480 = vmatprep.subr.mxu0 %v38
  %481 = vmatpush1.msra.mxu0 %v37
  %482 = vmatprep.subr.mxu0 %v199
  %483 = vmatpush1.msra.mxu0 %v198
  %484 = vmatprep.subr.mxu0 %v159
  %485 = vmatpush1.msra.mxu0 %v158
  %486 = vmatprep.subr.mxu0 %v119
  %487 = vmatpush1.msra.mxu0 %v118
  %488 = vmatprep.subr.mxu0 %v79
  %489 = vmatpush1.msra.mxu0 %v78
  %490 = vmatprep.subr.mxu0 0.0
  %491 = vmatpush2.msra.mxu0 0.0
  %492 = vmatprep.subr.mxu0 0.0
  %493 = vmatpush2.msra.mxu0 0.0
  %494 = vmatprep.subr.mxu0 0.0
  %495 = vmatpush2.msra.mxu0 0.0
  %496 = vmatprep.subr.mxu0 0.0
  %497 = vmatpush2.msra.mxu0 0.0
  %498 = vmatprep.subr.mxu0 0.0
  %499 = vmatpush2.msra.mxu0 0.0
  %500 = vmatprep.subr.mxu0 0.0
  %501 = vmatpush2.msra.mxu0 0.0
  %502 = vmatprep.subr.mxu0 0.0
  %503 = vmatpush2.msra.mxu0 0.0
  %504 = vmatprep.subr.mxu0 0.0
  %505 = vmatpush2.msra.mxu0 0.0
  %506 = vmatprep.subr.mxu0 0.0
  %507 = vmatpush2.msra.mxu0 0.0
  %508 = vmatprep.subr.mxu0 0.0
  %509 = vmatpush2.msra.mxu0 0.0
  %510 = vmatprep.subr.mxu0 0.0
  %511 = vmatpush2.msra.mxu0 0.0
  %512 = vmatprep.subr.mxu0 0.0
  %513 = vmatpush2.msra.mxu0 0.0
  %514 = vmatprep.subr.mxu0 0.0
  %515 = vmatpush2.msra.mxu0 0.0
  %516 = vmatprep.subr.mxu0 0.0
  %517 = vmatpush2.msra.mxu0 0.0
  %518 = vmatprep.subr.mxu0 0.0
  %519 = vmatpush2.msra.mxu0 0.0
  %520 = vmatprep.subr.mxu0 0.0
  %521 = vmatpush2.msra.mxu0 0.0
  %522 = vmatprep.mubr.f32.mxu0 0.0
  %523 = vmatmul.mubr.f32.gmra.mxu0 %v376
  %v524 = vpop.f32.mrf.mxu0
  %v525 = vadd.f32 %v367, %v524
  %v526 = vpop.f32.mrf.mxu0
  %v527 = vadd.f32 %v367, %v526
  %528 = vmatprep.mubr.f32.mxu0 0.0
  %529 = vmatmul.mubr.f32.gmra.mxu0 %v379
  %v530 = vpop.f32.mrf.mxu0
  %v531 = vadd.f32 %v372, %v530
  %v532 = vpop.f32.mrf.mxu0
  %v533 = vadd.f32 %v372, %v532
  %534 = vdwg.mxu0
  %v535 = vmax.f32 %v448, 0.0
  %v536 = vmax.f32 %v450, 0.0
  %v537 = vmax.f32 %v525, 0.0
  %v538 = vmax.f32 %v527, 0.0
  %v539 = vmax.f32 %v454, 0.0
  %v540 = vmax.f32 %v456, 0.0
  %v541 = vmax.f32 %v531, 0.0
  %v542 = vmax.f32 %v533, 0.0
  %543 = vrot.lane.b32.xlu0 %v535, 17
  %v544 = vpop.permute.xlu0 %543
  %545 = vrot.lane.b32.xlu0 %v539, 17
  %v546 = vpop.permute.xlu0 %545
  %547 = vrot.lane.b32.xlu0 %v536, 17
  %v548 = vpop.permute.xlu0 %547
  %549 = vrot.lane.b32.xlu0 %v540, 17
  %v550 = vpop.permute.xlu0 %549
  %551 = vrot.lane.b32.xlu0 %v537, 17
  %v552 = vpop.permute.xlu0 %551
  %553 = vrot.lane.b32.xlu0 %v541, 17
  %v554 = vpop.permute.xlu0 %553
  %555 = vrot.lane.b32.xlu0 %v538, 17
  %v556 = vpop.permute.xlu0 %555
  %557 = vrot.lane.b32.xlu0 %v542, 17
  %v558 = vpop.permute.xlu0 %557
  %v559 = vsel %vm49, %v552, %v556
  %v560 = vsel %vm49, %v554, %v558
  %v561 = vsel %vm49, %v548, %v552
  %v562 = vsel %vm49, %v550, %v554
  %v563 = vsel %vm49, %v544, %v548
  %v564 = vsel %vm49, %v546, %v550
  %v565 = vsel %vm49, %v556, %v544
  %v566 = vsel %vm49, %v558, %v546
  %v567 = vmul.f32 %v565, %v59
  %v568 = vmul.f32 %v563, %v63
  %v569 = vmul.f32 %v561, %v67
  %v570 = vmul.f32 %v559, %v71
  %v571 = vmul.f32 %v566, %v59
  %v572 = vmul.f32 %v564, %v63
  %v573 = vmul.f32 %v562, %v67
  %v574 = vmul.f32 %v560, %v71
  %575 = vst [vmem:[#allocation2] sm:$0xff] %v567
  %576 = vst [vmem:[#allocation2 + $0x8] sm:$0xff] %v568
  %577 = vst [vmem:[#allocation2 + $0x10] sm:$0xff] %v569
  %578 = vst [vmem:[#allocation2 + $0x18] sm:$0xff] %v570
  %579 = vst [vmem:[#allocation2 + $0x20] sm:$0xff] %v571
  %580 = vst [vmem:[#allocation2 + $0x28] sm:$0xff] %v572
  %581 = vst [vmem:[#allocation2 + $0x30] sm:$0xff] %v573
  %582 = vst [vmem:[#allocation2 + $0x38] sm:$0xff] %v574
  %583 = vrot.lane.b32.xlu0 %v535, 16
  %v584 = vpop.permute.xlu0 %583
  %585 = vrot.lane.b32.xlu0 %v539, 16
  %v586 = vpop.permute.xlu0 %585
  %587 = vrot.lane.b32.xlu0 %v536, 16
  %v588 = vpop.permute.xlu0 %587
  %589 = vrot.lane.b32.xlu0 %v540, 16
  %v590 = vpop.permute.xlu0 %589
  %591 = vrot.lane.b32.xlu0 %v537, 16
  %v592 = vpop.permute.xlu0 %591
  %593 = vrot.lane.b32.xlu0 %v541, 16
  %v594 = vpop.permute.xlu0 %593
  %595 = vrot.lane.b32.xlu0 %v538, 16
  %v596 = vpop.permute.xlu0 %595
  %597 = vrot.lane.b32.xlu0 %v542, 16
  %v598 = vpop.permute.xlu0 %597
  %v599 = vsel %vm88, %v592, %v596
  %v600 = vsel %vm88, %v594, %v598
  %v601 = vsel %vm88, %v588, %v592
  %v602 = vsel %vm88, %v590, %v594
  %v603 = vsel %vm88, %v584, %v588
  %v604 = vsel %vm88, %v586, %v590
  %v605 = vsel %vm88, %v596, %v584
  %v606 = vsel %vm88, %v598, %v586
  %v607 = vld [vmem:[%s93] ss:$8 sm:$0xf]
  %v609 = vlaneseq
  %v610 = vshrl.u32 %v609, 7
  %v611 = vsub.s32 0, %v610
  %v612 = vrot.slane %v607, %v611
  %v613 = vlaneseq
  %v614 = vshrl.u32 %v613, 7
  %v615 = vsub.s32 1, %v614
  %v616 = vrot.slane %v607, %v615
  %v617 = vlaneseq
  %v618 = vshrl.u32 %v617, 7
  %v619 = vsub.s32 2, %v618
  %v620 = vrot.slane %v607, %v619
  %v621 = vlaneseq
  %v622 = vshrl.u32 %v621, 7
  %v623 = vsub.s32 3, %v622
  %v624 = vrot.slane %v607, %v623
  %v629 = vmul.f32 %v605, %v612
  %v630 = vmul.f32 %v603, %v616
  %v631 = vmul.f32 %v601, %v620
  %v632 = vmul.f32 %v599, %v624
  %v633 = vmul.f32 %v606, %v612
  %v634 = vmul.f32 %v604, %v616
  %v635 = vmul.f32 %v602, %v620
  %v636 = vmul.f32 %v600, %v624
  %637 = vst [vmem:[#allocation2 + $0x40] sm:$0xff] %v629
  %638 = vst [vmem:[#allocation2 + $0x48] sm:$0xff] %v630
  %639 = vst [vmem:[#allocation2 + $0x50] sm:$0xff] %v631
  %640 = vst [vmem:[#allocation2 + $0x58] sm:$0xff] %v632
  %641 = vst [vmem:[#allocation2 + $0x60] sm:$0xff] %v633
  %642 = vst [vmem:[#allocation2 + $0x68] sm:$0xff] %v634
  %643 = vst [vmem:[#allocation2 + $0x70] sm:$0xff] %v635
  %644 = vst [vmem:[#allocation2 + $0x78] sm:$0xff] %v636
  %645 = vrot.lane.b32.xlu0 %v535, 15
  %v646 = vpop.permute.xlu0 %645
  %647 = vrot.lane.b32.xlu0 %v539, 15
  %v648 = vpop.permute.xlu0 %647
  %649 = vrot.lane.b32.xlu0 %v536, 15
  %v650 = vpop.permute.xlu0 %649
  %651 = vrot.lane.b32.xlu0 %v540, 15
  %v652 = vpop.permute.xlu0 %651
  %653 = vrot.lane.b32.xlu0 %v537, 15
  %v654 = vpop.permute.xlu0 %653
  %655 = vrot.lane.b32.xlu0 %v541, 15
  %v656 = vpop.permute.xlu0 %655
  %657 = vrot.lane.b32.xlu0 %v538, 15
  %v658 = vpop.permute.xlu0 %657
  %659 = vrot.lane.b32.xlu0 %v542, 15
  %v660 = vpop.permute.xlu0 %659
  %v661 = vsel %vm128, %v654, %v658
  %v662 = vsel %vm128, %v656, %v660
  %v663 = vsel %vm128, %v650, %v654
  %v664 = vsel %vm128, %v652, %v656
  %v665 = vsel %vm128, %v646, %v650
  %v666 = vsel %vm128, %v648, %v652
  %v667 = vsel %vm128, %v658, %v646
  %v668 = vsel %vm128, %v660, %v648
  %v669 = vld [vmem:[%s133] ss:$8 sm:$0xf]
  %v671 = vlaneseq
  %v672 = vshrl.u32 %v671, 7
  %v673 = vsub.s32 0, %v672
  %v674 = vrot.slane %v669, %v673
  %v675 = vlaneseq
  %v676 = vshrl.u32 %v675, 7
  %v677 = vsub.s32 1, %v676
  %v678 = vrot.slane %v669, %v677
  %v679 = vlaneseq
  %v680 = vshrl.u32 %v679, 7
  %v681 = vsub.s32 2, %v680
  %v682 = vrot.slane %v669, %v681
  %v683 = vlaneseq
  %v684 = vshrl.u32 %v683, 7
  %v685 = vsub.s32 3, %v684
  %v686 = vrot.slane %v669, %v685
  %v691 = vmul.f32 %v667, %v674
  %v692 = vmul.f32 %v665, %v678
  %v693 = vmul.f32 %v663, %v682
  %v694 = vmul.f32 %v661, %v686
  %v695 = vmul.f32 %v668, %v674
  %v696 = vmul.f32 %v666, %v678
  %v697 = vmul.f32 %v664, %v682
  %v698 = vmul.f32 %v662, %v686
  %699 = vst [vmem:[#allocation2 + $0x80] sm:$0xff] %v691
  %700 = vst [vmem:[#allocation2 + $0x88] sm:$0xff] %v692
  %701 = vst [vmem:[#allocation2 + $0x90] sm:$0xff] %v693
  %702 = vst [vmem:[#allocation2 + $0x98] sm:$0xff] %v694
  %703 = vst [vmem:[#allocation2 + $0xa0] sm:$0xff] %v695
  %704 = vst [vmem:[#allocation2 + $0xa8] sm:$0xff] %v696
  %705 = vst [vmem:[#allocation2 + $0xb0] sm:$0xff] %v697
  %706 = vst [vmem:[#allocation2 + $0xb8] sm:$0xff] %v698
  %707 = vrot.lane.b32.xlu0 %v535, 1
  %v708 = vpop.permute.xlu0 %707
  %709 = vrot.lane.b32.xlu0 %v539, 1
  %v710 = vpop.permute.xlu0 %709
  %711 = vrot.lane.b32.xlu0 %v536, 1
  %v712 = vpop.permute.xlu0 %711
  %713 = vrot.lane.b32.xlu0 %v540, 1
  %v714 = vpop.permute.xlu0 %713
  %715 = vrot.lane.b32.xlu0 %v537, 1
  %v716 = vpop.permute.xlu0 %715
  %717 = vrot.lane.b32.xlu0 %v541, 1
  %v718 = vpop.permute.xlu0 %717
  %719 = vrot.lane.b32.xlu0 %v538, 1
  %v720 = vpop.permute.xlu0 %719
  %721 = vrot.lane.b32.xlu0 %v542, 1
  %v722 = vpop.permute.xlu0 %721
  %v723 = vsel %vm168, %v716, %v720
  %v724 = vsel %vm168, %v718, %v722
  %v725 = vsel %vm168, %v712, %v716
  %v726 = vsel %vm168, %v714, %v718
  %v727 = vsel %vm168, %v708, %v712
  %v728 = vsel %vm168, %v710, %v714
  %v729 = vsel %vm168, %v720, %v708
  %v730 = vsel %vm168, %v722, %v710
  %v731 = vld [vmem:[%s173] ss:$8 sm:$0xf]
  %v733 = vlaneseq
  %v734 = vshrl.u32 %v733, 7
  %v735 = vsub.s32 0, %v734
  %v736 = vrot.slane %v731, %v735
  %v737 = vlaneseq
  %v738 = vshrl.u32 %v737, 7
  %v739 = vsub.s32 1, %v738
  %v740 = vrot.slane %v731, %v739
  %v741 = vlaneseq
  %v742 = vshrl.u32 %v741, 7
  %v743 = vsub.s32 2, %v742
  %v744 = vrot.slane %v731, %v743
  %v745 = vlaneseq
  %v746 = vshrl.u32 %v745, 7
  %v747 = vsub.s32 3, %v746
  %v748 = vrot.slane %v731, %v747
  %v753 = vmul.f32 %v729, %v736
  %v754 = vmul.f32 %v727, %v740
  %v755 = vmul.f32 %v725, %v744
  %v756 = vmul.f32 %v723, %v748
  %v757 = vmul.f32 %v730, %v736
  %v758 = vmul.f32 %v728, %v740
  %v759 = vmul.f32 %v726, %v744
  %v760 = vmul.f32 %v724, %v748
  %761 = vst [vmem:[#allocation2 + $0xc0] sm:$0xff] %v753
  %762 = vst [vmem:[#allocation2 + $0xc8] sm:$0xff] %v754
  %763 = vst [vmem:[#allocation2 + $0xd0] sm:$0xff] %v755
  %764 = vst [vmem:[#allocation2 + $0xd8] sm:$0xff] %v756
  %765 = vst [vmem:[#allocation2 + $0xe0] sm:$0xff] %v757
  %766 = vst [vmem:[#allocation2 + $0xe8] sm:$0xff] %v758
  %767 = vst [vmem:[#allocation2 + $0xf0] sm:$0xff] %v759
  %768 = vst [vmem:[#allocation2 + $0xf8] sm:$0xff] %v760
  %769 = vst [vmem:[#allocation2 + $0x100] sm:$0xff] %v535
  %770 = vst [vmem:[#allocation2 + $0x108] sm:$0xff] %v536
  %771 = vst [vmem:[#allocation2 + $0x110] sm:$0xff] %v537
  %772 = vst [vmem:[#allocation2 + $0x118] sm:$0xff] %v538
  %773 = vst [vmem:[#allocation2 + $0x120] sm:$0xff] %v539
  %774 = vst [vmem:[#allocation2 + $0x128] sm:$0xff] %v540
  %775 = vst [vmem:[#allocation2 + $0x130] sm:$0xff] %v541
  %776 = vst [vmem:[#allocation2 + $0x138] sm:$0xff] %v542
  %777 = vrot.lane.b32.xlu0 %v535, 127
  %v778 = vpop.permute.xlu0 %777
  %779 = vrot.lane.b32.xlu0 %v539, 127
  %v780 = vpop.permute.xlu0 %779
  %781 = vrot.lane.b32.xlu0 %v536, 127
  %v782 = vpop.permute.xlu0 %781
  %783 = vrot.lane.b32.xlu0 %v540, 127
  %v784 = vpop.permute.xlu0 %783
  %785 = vrot.lane.b32.xlu0 %v537, 127
  %v786 = vpop.permute.xlu0 %785
  %787 = vrot.lane.b32.xlu0 %v541, 127
  %v788 = vpop.permute.xlu0 %787
  %789 = vrot.lane.b32.xlu0 %v538, 127
  %v790 = vpop.permute.xlu0 %789
  %791 = vrot.lane.b32.xlu0 %v542, 127
  %v792 = vpop.permute.xlu0 %791
  %v793 = vsel %vm208, %v786, %v790
  %v794 = vsel %vm208, %v788, %v792
  %v795 = vsel %vm208, %v782, %v786
  %v796 = vsel %vm208, %v784, %v788
  %v797 = vsel %vm208, %v778, %v782
  %v798 = vsel %vm208, %v780, %v784
  %v799 = vsel %vm208, %v790, %v778
  %v800 = vsel %vm208, %v792, %v780
  %v801 = vld [vmem:[%s213] ss:$8 sm:$0xf]
  %v803 = vlaneseq
  %v804 = vshrl.u32 %v803, 7
  %v805 = vsub.s32 0, %v804
  %v806 = vrot.slane %v801, %v805
  %v807 = vlaneseq
  %v808 = vshrl.u32 %v807, 7
  %v809 = vsub.s32 1, %v808
  %v810 = vrot.slane %v801, %v809
  %v811 = vlaneseq
  %v812 = vshrl.u32 %v811, 7
  %v813 = vsub.s32 2, %v812
  %v814 = vrot.slane %v801, %v813
  %v815 = vlaneseq
  %v816 = vshrl.u32 %v815, 7
  %v817 = vsub.s32 3, %v816
  %v818 = vrot.slane %v801, %v817
  %v823 = vmul.f32 %v797, %v806
  %v824 = vmul.f32 %v795, %v810
  %v825 = vmul.f32 %v793, %v814
  %v826 = vmul.f32 %v799, %v818
  %v827 = vmul.f32 %v798, %v806
  %v828 = vmul.f32 %v796, %v810
  %v829 = vmul.f32 %v794, %v814
  %v830 = vmul.f32 %v800, %v818
  %831 = vst [vmem:[#allocation2 + $0x140] sm:$0xff] %v823
  %832 = vst [vmem:[#allocation2 + $0x148] sm:$0xff] %v824
  %833 = vst [vmem:[#allocation2 + $0x150] sm:$0xff] %v825
  %834 = vst [vmem:[#allocation2 + $0x158] sm:$0xff] %v826
  %835 = vst [vmem:[#allocation2 + $0x160] sm:$0xff] %v827
  %836 = vst [vmem:[#allocation2 + $0x168] sm:$0xff] %v828
  %837 = vst [vmem:[#allocation2 + $0x170] sm:$0xff] %v829
  %838 = vst [vmem:[#allocation2 + $0x178] sm:$0xff] %v830
  %839 = vrot.lane.b32.xlu0 %v535, 113
  %v840 = vpop.permute.xlu0 %839
  %841 = vrot.lane.b32.xlu0 %v539, 113
  %v842 = vpop.permute.xlu0 %841
  %843 = vrot.lane.b32.xlu0 %v536, 113
  %v844 = vpop.permute.xlu0 %843
  %845 = vrot.lane.b32.xlu0 %v540, 113
  %v846 = vpop.permute.xlu0 %845
  %847 = vrot.lane.b32.xlu0 %v537, 113
  %v848 = vpop.permute.xlu0 %847
  %849 = vrot.lane.b32.xlu0 %v541, 113
  %v850 = vpop.permute.xlu0 %849
  %851 = vrot.lane.b32.xlu0 %v538, 113
  %v852 = vpop.permute.xlu0 %851
  %853 = vrot.lane.b32.xlu0 %v542, 113
  %v854 = vpop.permute.xlu0 %853
  %v855 = vsel %vm248, %v848, %v852
  %v856 = vsel %vm248, %v850, %v854
  %v857 = vsel %vm248, %v844, %v848
  %v858 = vsel %vm248, %v846, %v850
  %v859 = vsel %vm248, %v840, %v844
  %v860 = vsel %vm248, %v842, %v846
  %v861 = vsel %vm248, %v852, %v840
  %v862 = vsel %vm248, %v854, %v842
  %v863 = vld [vmem:[%s253] ss:$8 sm:$0xf]
  %v865 = vlaneseq
  %v866 = vshrl.u32 %v865, 7
  %v867 = vsub.s32 0, %v866
  %v868 = vrot.slane %v863, %v867
  %v869 = vlaneseq
  %v870 = vshrl.u32 %v869, 7
  %v871 = vsub.s32 1, %v870
  %v872 = vrot.slane %v863, %v871
  %v873 = vlaneseq
  %v874 = vshrl.u32 %v873, 7
  %v875 = vsub.s32 2, %v874
  %v876 = vrot.slane %v863, %v875
  %v877 = vlaneseq
  %v878 = vshrl.u32 %v877, 7
  %v879 = vsub.s32 3, %v878
  %v880 = vrot.slane %v863, %v879
  %v885 = vmul.f32 %v859, %v868
  %v886 = vmul.f32 %v857, %v872
  %v887 = vmul.f32 %v855, %v876
  %v888 = vmul.f32 %v861, %v880
  %v889 = vmul.f32 %v860, %v868
  %v890 = vmul.f32 %v858, %v872
  %v891 = vmul.f32 %v856, %v876
  %v892 = vmul.f32 %v862, %v880
  %893 = vst [vmem:[#allocation2 + $0x180] sm:$0xff] %v885
  %894 = vst [vmem:[#allocation2 + $0x188] sm:$0xff] %v886
  %895 = vst [vmem:[#allocation2 + $0x190] sm:$0xff] %v887
  %896 = vst [vmem:[#allocation2 + $0x198] sm:$0xff] %v888
  %897 = vst [vmem:[#allocation2 + $0x1a0] sm:$0xff] %v889
  %898 = vst [vmem:[#allocation2 + $0x1a8] sm:$0xff] %v890
  %899 = vst [vmem:[#allocation2 + $0x1b0] sm:$0xff] %v891
  %900 = vst [vmem:[#allocation2 + $0x1b8] sm:$0xff] %v892
  %901 = vrot.lane.b32.xlu0 %v535, 112
  %v902 = vpop.permute.xlu0 %901
  %903 = vrot.lane.b32.xlu0 %v539, 112
  %v904 = vpop.permute.xlu0 %903
  %905 = vrot.lane.b32.xlu0 %v536, 112
  %v906 = vpop.permute.xlu0 %905
  %907 = vrot.lane.b32.xlu0 %v540, 112
  %v908 = vpop.permute.xlu0 %907
  %909 = vrot.lane.b32.xlu0 %v537, 112
  %v910 = vpop.permute.xlu0 %909
  %911 = vrot.lane.b32.xlu0 %v541, 112
  %v912 = vpop.permute.xlu0 %911
  %913 = vrot.lane.b32.xlu0 %v538, 112
  %v914 = vpop.permute.xlu0 %913
  %915 = vrot.lane.b32.xlu0 %v542, 112
  %v916 = vpop.permute.xlu0 %915
  %v917 = vsel %vm288, %v910, %v914
  %v918 = vsel %vm288, %v912, %v916
  %v919 = vsel %vm288, %v906, %v910
  %v920 = vsel %vm288, %v908, %v912
  %v921 = vsel %vm288, %v902, %v906
  %v922 = vsel %vm288, %v904, %v908
  %v923 = vsel %vm288, %v914, %v902
  %v924 = vsel %vm288, %v916, %v904
  %v925 = vld [vmem:[%s293] ss:$8 sm:$0xf]
  %v927 = vlaneseq
  %v928 = vshrl.u32 %v927, 7
  %v929 = vsub.s32 0, %v928
  %v930 = vrot.slane %v925, %v929
  %v931 = vlaneseq
  %v932 = vshrl.u32 %v931, 7
  %v933 = vsub.s32 1, %v932
  %v934 = vrot.slane %v925, %v933
  %v935 = vlaneseq
  %v936 = vshrl.u32 %v935, 7
  %v937 = vsub.s32 2, %v936
  %v938 = vrot.slane %v925, %v937
  %v939 = vlaneseq
  %v940 = vshrl.u32 %v939, 7
  %v941 = vsub.s32 3, %v940
  %v942 = vrot.slane %v925, %v941
  %v947 = vmul.f32 %v921, %v930
  %v948 = vmul.f32 %v919, %v934
  %v949 = vmul.f32 %v917, %v938
  %v950 = vmul.f32 %v923, %v942
  %v951 = vmul.f32 %v922, %v930
  %v952 = vmul.f32 %v920, %v934
  %v953 = vmul.f32 %v918, %v938
  %v954 = vmul.f32 %v924, %v942
  %955 = vst [vmem:[#allocation2 + $0x1c0] sm:$0xff] %v947
  %956 = vst [vmem:[#allocation2 + $0x1c8] sm:$0xff] %v948
  %957 = vst [vmem:[#allocation2 + $0x1d0] sm:$0xff] %v949
  %958 = vst [vmem:[#allocation2 + $0x1d8] sm:$0xff] %v950
  %959 = vst [vmem:[#allocation2 + $0x1e0] sm:$0xff] %v951
  %960 = vst [vmem:[#allocation2 + $0x1e8] sm:$0xff] %v952
  %961 = vst [vmem:[#allocation2 + $0x1f0] sm:$0xff] %v953
  %962 = vst [vmem:[#allocation2 + $0x1f8] sm:$0xff] %v954
  %963 = vrot.lane.b32.xlu0 %v535, 111
  %v964 = vpop.permute.xlu0 %963
  %965 = vrot.lane.b32.xlu0 %v539, 111
  %v966 = vpop.permute.xlu0 %965
  %967 = vrot.lane.b32.xlu0 %v536, 111
  %v968 = vpop.permute.xlu0 %967
  %969 = vrot.lane.b32.xlu0 %v540, 111
  %v970 = vpop.permute.xlu0 %969
  %971 = vrot.lane.b32.xlu0 %v537, 111
  %v972 = vpop.permute.xlu0 %971
  %973 = vrot.lane.b32.xlu0 %v541, 111
  %v974 = vpop.permute.xlu0 %973
  %975 = vrot.lane.b32.xlu0 %v538, 111
  %v976 = vpop.permute.xlu0 %975
  %977 = vrot.lane.b32.xlu0 %v542, 111
  %v978 = vpop.permute.xlu0 %977
  %v979 = vsel %vm328, %v972, %v976
  %v980 = vsel %vm328, %v974, %v978
  %v981 = vsel %vm328, %v968, %v972
  %v982 = vsel %vm328, %v970, %v974
  %v983 = vsel %vm328, %v964, %v968
  %v984 = vsel %vm328, %v966, %v970
  %v985 = vsel %vm328, %v976, %v964
  %v986 = vsel %vm328, %v978, %v966
  %v987 = vld [vmem:[%s333] ss:$8 sm:$0xf]
  %v989 = vlaneseq
  %v990 = vshrl.u32 %v989, 7
  %v991 = vsub.s32 0, %v990
  %v992 = vrot.slane %v987, %v991
  %v993 = vlaneseq
  %v994 = vshrl.u32 %v993, 7
  %v995 = vsub.s32 1, %v994
  %v996 = vrot.slane %v987, %v995
  %v997 = vlaneseq
  %v998 = vshrl.u32 %v997, 7
  %v999 = vsub.s32 2, %v998
  %v1000 = vrot.slane %v987, %v999
  %v1001 = vlaneseq
  %v1002 = vshrl.u32 %v1001, 7
  %v1003 = vsub.s32 3, %v1002
  %v1004 = vrot.slane %v987, %v1003
  %v1009 = vmul.f32 %v983, %v992
  %v1010 = vmul.f32 %v981, %v996
  %v1011 = vmul.f32 %v979, %v1000
  %v1012 = vmul.f32 %v985, %v1004
  %v1013 = vmul.f32 %v984, %v992
  %v1014 = vmul.f32 %v982, %v996
  %v1015 = vmul.f32 %v980, %v1000
  %v1016 = vmul.f32 %v986, %v1004
  %1017 = vst [vmem:[#allocation2 + $0x200] sm:$0xff] %v1009
  %1018 = vst [vmem:[#allocation2 + $0x208] sm:$0xff] %v1010
  %1019 = vst [vmem:[#allocation2 + $0x210] sm:$0xff] %v1011
  %1020 = vst [vmem:[#allocation2 + $0x218] sm:$0xff] %v1012
  %1021 = vst [vmem:[#allocation2 + $0x220] sm:$0xff] %v1013
  %1022 = vst [vmem:[#allocation2 + $0x228] sm:$0xff] %v1014
  %1023 = vst [vmem:[#allocation2 + $0x230] sm:$0xff] %v1015
  %1024 = vst [vmem:[#allocation2 + $0x238] sm:$0xff] %v1016
  %v1025 = vld [vmem:[%s4] sm:$0xff]
  %v1026 = vld [vmem:[%s4 + $0x8] sm:$0xff]
  %v1027 = vld [vmem:[%s4 + $0x10] sm:$0xff]
  %v1028 = vld [vmem:[%s4 + $0x18] sm:$0xff]
  %v1029 = vld [vmem:[%s4 + $0x20] sm:$0xff]
  %v1030 = vld [vmem:[%s4 + $0x28] sm:$0xff]
  %v1031 = vld [vmem:[%s4 + $0x30] sm:$0xff]
  %v1032 = vld [vmem:[%s4 + $0x38] sm:$0xff]
  %v1033 = vld [vmem:[#allocation2] sm:$0xff]
  %v1034 = vld [vmem:[#allocation2 + $0x8] sm:$0xff]
  %v1035 = vld [vmem:[#allocation2 + $0x10] sm:$0xff]
  %v1036 = vld [vmem:[#allocation2 + $0x18] sm:$0xff]
  %v1037 = vld [vmem:[#allocation2 + $0x20] sm:$0xff]
  %v1038 = vld [vmem:[#allocation2 + $0x28] sm:$0xff]
  %v1039 = vld [vmem:[#allocation2 + $0x30] sm:$0xff]
  %v1040 = vld [vmem:[#allocation2 + $0x38] sm:$0xff]
  %v1041 = vld [vmem:[#allocation2 + $0x40] sm:$0xff]
  %v1042 = vld [vmem:[#allocation2 + $0x48] sm:$0xff]
  %v1043 = vld [vmem:[#allocation2 + $0x50] sm:$0xff]
  %v1044 = vld [vmem:[#allocation2 + $0x58] sm:$0xff]
  %v1045 = vld [vmem:[#allocation2 + $0x60] sm:$0xff]
  %v1046 = vld [vmem:[#allocation2 + $0x68] sm:$0xff]
  %v1047 = vld [vmem:[#allocation2 + $0x70] sm:$0xff]
  %v1048 = vld [vmem:[#allocation2 + $0x78] sm:$0xff]
  %v1049 = vld [vmem:[#allocation2 + $0x80] sm:$0xff]
  %v1050 = vld [vmem:[#allocation2 + $0x88] sm:$0xff]
  %v1051 = vld [vmem:[#allocation2 + $0x90] sm:$0xff]
  %v1052 = vld [vmem:[#allocation2 + $0x98] sm:$0xff]
  %v1053 = vld [vmem:[#allocation2 + $0xa0] sm:$0xff]
  %v1054 = vld [vmem:[#allocation2 + $0xa8] sm:$0xff]
  %v1055 = vld [vmem:[#allocation2 + $0xb0] sm:$0xff]
  %v1056 = vld [vmem:[#allocation2 + $0xb8] sm:$0xff]
  %v1057 = vld [vmem:[#allocation2 + $0xc0] sm:$0xff]
  %v1058 = vld [vmem:[#allocation2 + $0xc8] sm:$0xff]
  %v1059 = vld [vmem:[#allocation2 + $0xd0] sm:$0xff]
  %v1060 = vld [vmem:[#allocation2 + $0xd8] sm:$0xff]
  %v1061 = vld [vmem:[#allocation2 + $0xe0] sm:$0xff]
  %v1062 = vld [vmem:[#allocation2 + $0xe8] sm:$0xff]
  %v1063 = vld [vmem:[#allocation2 + $0xf0] sm:$0xff]
  %v1064 = vld [vmem:[#allocation2 + $0xf8] sm:$0xff]
  %v1065 = vld [vmem:[#allocation2 + $0x100] sm:$0xff]
  %v1066 = vld [vmem:[#allocation2 + $0x108] sm:$0xff]
  %v1067 = vld [vmem:[#allocation2 + $0x110] sm:$0xff]
  %v1068 = vld [vmem:[#allocation2 + $0x118] sm:$0xff]
  %v1069 = vld [vmem:[#allocation2 + $0x120] sm:$0xff]
  %v1070 = vld [vmem:[#allocation2 + $0x128] sm:$0xff]
  %v1071 = vld [vmem:[#allocation2 + $0x130] sm:$0xff]
  %v1072 = vld [vmem:[#allocation2 + $0x138] sm:$0xff]
  %v1073 = vld [vmem:[#allocation2 + $0x140] sm:$0xff]
  %v1074 = vld [vmem:[#allocation2 + $0x148] sm:$0xff]
  %v1075 = vld [vmem:[#allocation2 + $0x150] sm:$0xff]
  %v1076 = vld [vmem:[#allocation2 + $0x158] sm:$0xff]
  %v1077 = vld [vmem:[#allocation2 + $0x160] sm:$0xff]
  %v1078 = vld [vmem:[#allocation2 + $0x168] sm:$0xff]
  %v1079 = vld [vmem:[#allocation2 + $0x170] sm:$0xff]
  %v1080 = vld [vmem:[#allocation2 + $0x178] sm:$0xff]
  %v1081 = vld [vmem:[#allocation2 + $0x180] sm:$0xff]
  %v1082 = vld [vmem:[#allocation2 + $0x188] sm:$0xff]
  %v1083 = vld [vmem:[#allocation2 + $0x190] sm:$0xff]
  %v1084 = vld [vmem:[#allocation2 + $0x198] sm:$0xff]
  %v1085 = vld [vmem:[#allocation2 + $0x1a0] sm:$0xff]
  %v1086 = vld [vmem:[#allocation2 + $0x1a8] sm:$0xff]
  %v1087 = vld [vmem:[#allocation2 + $0x1b0] sm:$0xff]
  %v1088 = vld [vmem:[#allocation2 + $0x1b8] sm:$0xff]
  %v1089 = vld [vmem:[#allocation2 + $0x1c0] sm:$0xff]
  %v1090 = vld [vmem:[#allocation2 + $0x1c8] sm:$0xff]
  %v1091 = vld [vmem:[#allocation2 + $0x1d0] sm:$0xff]
  %v1092 = vld [vmem:[#allocation2 + $0x1d8] sm:$0xff]
  %v1093 = vld [vmem:[#allocation2 + $0x1e0] sm:$0xff]
  %v1094 = vld [vmem:[#allocation2 + $0x1e8] sm:$0xff]
  %v1095 = vld [vmem:[#allocation2 + $0x1f0] sm:$0xff]
  %v1096 = vld [vmem:[#allocation2 + $0x1f8] sm:$0xff]
  %v1097 = vld [vmem:[#allocation2 + $0x200] sm:$0xff]
  %v1098 = vld [vmem:[#allocation2 + $0x208] sm:$0xff]
  %v1099 = vld [vmem:[#allocation2 + $0x210] sm:$0xff]
  %v1100 = vld [vmem:[#allocation2 + $0x218] sm:$0xff]
  %v1101 = vld [vmem:[#allocation2 + $0x220] sm:$0xff]
  %v1102 = vld [vmem:[#allocation2 + $0x228] sm:$0xff]
  %v1103 = vld [vmem:[#allocation2 + $0x230] sm:$0xff]
  %v1104 = vld [vmem:[#allocation2 + $0x238] sm:$0xff]
  %v1105 = vld [vmem:[%s5] sm:$0xff]
  %v1106 = vld [vmem:[%s5 + $0x8] sm:$0xff]
  %v1107 = vld [vmem:[%s5 + $0x10] sm:$0xff]
  %v1108 = vld [vmem:[%s5 + $0x18] sm:$0xff]
  %1110 = vset.pattern.permute.xlu0 0
  %1111 = vperm.xlu0 %1110, %v1105
  %v1112 = vpop.permute.xlu0 %1111
  %1115 = vset.pattern.permute.xlu0 0
  %1116 = vperm.xlu0 %1115, %v1106
  %v1117 = vpop.permute.xlu0 %1116
  %1120 = vset.pattern.permute.xlu0 0
  %1121 = vperm.xlu0 %1120, %v1107
  %v1122 = vpop.permute.xlu0 %1121
  %1125 = vset.pattern.permute.xlu0 0
  %1126 = vperm.xlu0 %1125, %v1108
  %v1127 = vpop.permute.xlu0 %1126
  %vm1129 = vcmask 130048
  %v1131 = vsel %vm1129, %v1026, 0
  %v1134 = vsel %vm1129, %v1028, 0
  %v1137 = vsel %vm1129, %v1030, 0
  %v1140 = vsel %vm1129, %v1032, 0
  %1142 = vmatprep.subr.mxu0 %v1094
  %1143 = vmatpush1.msra.mxu0 %v1093
  %1144 = vmatprep.subr.mxu0 %v1090
  %1145 = vmatpush1.msra.mxu0 %v1089
  %1146 = vmatprep.subr.mxu0 %v1086
  %1147 = vmatpush1.msra.mxu0 %v1085
  %1148 = vmatprep.subr.mxu0 %v1082
  %1149 = vmatpush1.msra.mxu0 %v1081
  %1150 = vmatprep.subr.mxu0 %v1078
  %1151 = vmatpush1.msra.mxu0 %v1077
  %1152 = vmatprep.subr.mxu0 %v1074
  %1153 = vmatpush1.msra.mxu0 %v1073
  %1154 = vmatprep.subr.mxu0 %v1070
  %1155 = vmatpush1.msra.mxu0 %v1069
  %1156 = vmatprep.subr.mxu0 %v1066
  %1157 = vmatpush1.msra.mxu0 %v1065
  %1158 = vmatprep.subr.mxu0 %v1062
  %1159 = vmatpush1.msra.mxu0 %v1061
  %1160 = vmatprep.subr.mxu0 %v1058
  %1161 = vmatpush1.msra.mxu0 %v1057
  %1162 = vmatprep.subr.mxu0 %v1054
  %1163 = vmatpush1.msra.mxu0 %v1053
  %1164 = vmatprep.subr.mxu0 %v1050
  %1165 = vmatpush1.msra.mxu0 %v1049
  %1166 = vmatprep.subr.mxu0 %v1046
  %1167 = vmatpush1.msra.mxu0 %v1045
  %1168 = vmatprep.subr.mxu0 %v1042
  %1169 = vmatpush1.msra.mxu0 %v1041
  %1170 = vmatprep.subr.mxu0 %v1038
  %1171 = vmatpush1.msra.mxu0 %v1037
  %1172 = vmatprep.subr.mxu0 %v1034
  %1173 = vmatpush1.msra.mxu0 %v1033
  %1174 = vmatprep.subr.mxu0 0.0
  %1175 = vmatpush2.msra.mxu0 0.0
  %1176 = vmatprep.subr.mxu0 0.0
  %1177 = vmatpush2.msra.mxu0 0.0
  %1178 = vmatprep.subr.mxu0 0.0
  %1179 = vmatpush2.msra.mxu0 0.0
  %1180 = vmatprep.subr.mxu0 0.0
  %1181 = vmatpush2.msra.mxu0 0.0
  %1182 = vmatprep.subr.mxu0 0.0
  %1183 = vmatpush2.msra.mxu0 0.0
  %1184 = vmatprep.subr.mxu0 0.0
  %1185 = vmatpush2.msra.mxu0 0.0
  %1186 = vmatprep.subr.mxu0 0.0
  %1187 = vmatpush2.msra.mxu0 0.0
  %1188 = vmatprep.subr.mxu0 0.0
  %1189 = vmatpush2.msra.mxu0 0.0
  %1190 = vmatprep.subr.mxu0 0.0
  %1191 = vmatpush2.msra.mxu0 0.0
  %1192 = vmatprep.subr.mxu0 0.0
  %1193 = vmatpush2.msra.mxu0 0.0
  %1194 = vmatprep.subr.mxu0 0.0
  %1195 = vmatpush2.msra.mxu0 0.0
  %1196 = vmatprep.subr.mxu0 0.0
  %1197 = vmatpush2.msra.mxu0 0.0
  %1198 = vmatprep.subr.mxu0 0.0
  %1199 = vmatpush2.msra.mxu0 0.0
  %1200 = vmatprep.subr.mxu0 0.0
  %1201 = vmatpush2.msra.mxu0 0.0
  %1202 = vmatprep.subr.mxu0 %v1102
  %1203 = vmatpush2.msra.mxu0 %v1101
  %1204 = vmatprep.subr.mxu0 %v1098
  %1205 = vmatpush2.msra.mxu0 %v1097
  %1206 = vmatprep.mubr.f32.mxu0 %v1131
  %1207 = vmatmul.mubr.f32.gmra.mxu0 %v1025
  %v1208 = vpop.f32.mrf.mxu0
  %v1209 = vadd.f32 %v1112, %v1208
  %v1210 = vpop.f32.mrf.mxu0
  %v1211 = vadd.f32 %v1112, %v1210
  %1212 = vmatprep.mubr.f32.mxu0 %v1134
  %1213 = vmatmul.mubr.f32.gmra.mxu0 %v1027
  %v1214 = vpop.f32.mrf.mxu0
  %v1215 = vadd.f32 %v1117, %v1214
  %v1216 = vpop.f32.mrf.mxu0
  %v1217 = vadd.f32 %v1117, %v1216
  %1218 = vmatprep.mubr.f32.mxu0 %v1137
  %1219 = vmatmul.mubr.f32.gmra.mxu0 %v1029
  %v1220 = vpop.f32.mrf.mxu0
  %v1221 = vadd.f32 %v1122, %v1220
  %v1222 = vpop.f32.mrf.mxu0
  %v1223 = vadd.f32 %v1122, %v1222
  %1224 = vmatprep.mubr.f32.mxu0 %v1140
  %1225 = vmatmul.mubr.f32.gmra.mxu0 %v1031
  %v1226 = vpop.f32.mrf.mxu0
  %v1227 = vadd.f32 %v1127, %v1226
  %v1228 = vpop.f32.mrf.mxu0
  %v1229 = vadd.f32 %v1127, %v1228
  %1230 = vdwg.mxu0
  %1231 = vmatprep.subr.mxu0 %v1096
  %1232 = vmatpush1.msra.mxu0 %v1095
  %1233 = vmatprep.subr.mxu0 %v1092
  %1234 = vmatpush1.msra.mxu0 %v1091
  %1235 = vmatprep.subr.mxu0 %v1088
  %1236 = vmatpush1.msra.mxu0 %v1087
  %1237 = vmatprep.subr.mxu0 %v1084
  %1238 = vmatpush1.msra.mxu0 %v1083
  %1239 = vmatprep.subr.mxu0 %v1080
  %1240 = vmatpush1.msra.mxu0 %v1079
  %1241 = vmatprep.subr.mxu0 %v1076
  %1242 = vmatpush1.msra.mxu0 %v1075
  %1243 = vmatprep.subr.mxu0 %v1072
  %1244 = vmatpush1.msra.mxu0 %v1071
  %1245 = vmatprep.subr.mxu0 %v1068
  %1246 = vmatpush1.msra.mxu0 %v1067
  %1247 = vmatprep.subr.mxu0 %v1064
  %1248 = vmatpush1.msra.mxu0 %v1063
  %1249 = vmatprep.subr.mxu0 %v1060
  %1250 = vmatpush1.msra.mxu0 %v1059
  %1251 = vmatprep.subr.mxu0 %v1056
  %1252 = vmatpush1.msra.mxu0 %v1055
  %1253 = vmatprep.subr.mxu0 %v1052
  %1254 = vmatpush1.msra.mxu0 %v1051
  %1255 = vmatprep.subr.mxu0 %v1048
  %1256 = vmatpush1.msra.mxu0 %v1047
  %1257 = vmatprep.subr.mxu0 %v1044
  %1258 = vmatpush1.msra.mxu0 %v1043
  %1259 = vmatprep.subr.mxu0 %v1040
  %1260 = vmatpush1.msra.mxu0 %v1039
  %1261 = vmatprep.subr.mxu0 %v1036
  %1262 = vmatpush1.msra.mxu0 %v1035
  %1263 = vmatprep.subr.mxu0 0.0
  %1264 = vmatpush2.msra.mxu0 0.0
  %1265 = vmatprep.subr.mxu0 0.0
  %1266 = vmatpush2.msra.mxu0 0.0
  %1267 = vmatprep.subr.mxu0 0.0
  %1268 = vmatpush2.msra.mxu0 0.0
  %1269 = vmatprep.subr.mxu0 0.0
  %1270 = vmatpush2.msra.mxu0 0.0
  %1271 = vmatprep.subr.mxu0 0.0
  %1272 = vmatpush2.msra.mxu0 0.0
  %1273 = vmatprep.subr.mxu0 0.0
  %1274 = vmatpush2.msra.mxu0 0.0
  %1275 = vmatprep.subr.mxu0 0.0
  %1276 = vmatpush2.msra.mxu0 0.0
  %1277 = vmatprep.subr.mxu0 0.0
  %1278 = vmatpush2.msra.mxu0 0.0
  %1279 = vmatprep.subr.mxu0 0.0
  %1280 = vmatpush2.msra.mxu0 0.0
  %1281 = vmatprep.subr.mxu0 0.0
  %1282 = vmatpush2.msra.mxu0 0.0
  %1283 = vmatprep.subr.mxu0 0.0
  %1284 = vmatpush2.msra.mxu0 0.0
  %1285 = vmatprep.subr.mxu0 0.0
  %1286 = vmatpush2.msra.mxu0 0.0
  %1287 = vmatprep.subr.mxu0 0.0
  %1288 = vmatpush2.msra.mxu0 0.0
  %1289 = vmatprep.subr.mxu0 0.0
  %1290 = vmatpush2.msra.mxu0 0.0
  %1291 = vmatprep.subr.mxu0 %v1104
  %1292 = vmatpush2.msra.mxu0 %v1103
  %1293 = vmatprep.subr.mxu0 %v1100
  %1294 = vmatpush2.msra.mxu0 %v1099
  %1295 = vmatprep.mubr.f32.mxu0 %v1131
  %1296 = vmatmul.mubr.f32.gmra.mxu0 %v1025
  %v1297 = vpop.f32.mrf.mxu0
  %v1298 = vadd.f32 %v1112, %v1297
  %v1299 = vpop.f32.mrf.mxu0
  %v1300 = vadd.f32 %v1112, %v1299
  %1301 = vmatprep.mubr.f32.mxu0 %v1134
  %1302 = vmatmul.mubr.f32.gmra.mxu0 %v1027
  %v1303 = vpop.f32.mrf.mxu0
  %v1304 = vadd.f32 %v1117, %v1303
  %v1305 = vpop.f32.mrf.mxu0
  %v1306 = vadd.f32 %v1117, %v1305
  %1307 = vmatprep.mubr.f32.mxu0 %v1137
  %1308 = vmatmul.mubr.f32.gmra.mxu0 %v1029
  %v1309 = vpop.f32.mrf.mxu0
  %v1310 = vadd.f32 %v1122, %v1309
  %v1311 = vpop.f32.mrf.mxu0
  %v1312 = vadd.f32 %v1122, %v1311
  %1313 = vmatprep.mubr.f32.mxu0 %v1140
  %1314 = vmatmul.mubr.f32.gmra.mxu0 %v1031
  %v1315 = vpop.f32.mrf.mxu0
  %v1316 = vadd.f32 %v1127, %v1315
  %v1317 = vpop.f32.mrf.mxu0
  %v1318 = vadd.f32 %v1127, %v1317
  %1319 = vdwg.mxu0
  %v1320 = vmax.f32 %v1209, 0.0
  %v1321 = vmax.f32 %v1211, 0.0
  %v1322 = vmax.f32 %v1298, 0.0
  %v1323 = vmax.f32 %v1300, 0.0
  %v1324 = vmax.f32 %v1215, 0.0
  %v1325 = vmax.f32 %v1217, 0.0
  %v1326 = vmax.f32 %v1304, 0.0
  %v1327 = vmax.f32 %v1306, 0.0
  %v1328 = vmax.f32 %v1221, 0.0
  %v1329 = vmax.f32 %v1223, 0.0
  %v1330 = vmax.f32 %v1310, 0.0
  %v1331 = vmax.f32 %v1312, 0.0
  %v1332 = vmax.f32 %v1227, 0.0
  %v1333 = vmax.f32 %v1229, 0.0
  %v1334 = vmax.f32 %v1316, 0.0
  %v1335 = vmax.f32 %v1318, 0.0
  %1336 = vst [vmem:[%s6] sm:$0xff] %v535
  %1337 = vst [vmem:[%s6 + $0x8] sm:$0xff] %v536
  %1338 = vst [vmem:[%s6 + $0x10] sm:$0xff] %v539
  %1339 = vst [vmem:[%s6 + $0x18] sm:$0xff] %v540
  %1340 = vst [vmem:[%s7] sm:$0xff] %v1320
  %1341 = vst [vmem:[%s7 + $0x8] sm:$0xff] %v1321
  %1342 = vst [vmem:[%s7 + $0x10] sm:$0xff] %v1324
  %1343 = vst [vmem:[%s7 + $0x18] sm:$0xff] %v1325
  %1344 = vst [vmem:[%s7 + $0x20] sm:$0xff] %v1328
  %1345 = vst [vmem:[%s7 + $0x28] sm:$0xff] %v1329
  %1346 = vst [vmem:[%s7 + $0x30] sm:$0xff] %v1332
  %1347 = vst [vmem:[%s7 + $0x38] sm:$0xff] %v1333
  %s1348 = scalar_lea.vmem %s6, 32
  %1349 = vst [vmem:[%s1348] sm:$0xff] %v537
  %1350 = vst [vmem:[%s1348 + $0x8] sm:$0xff] %v538
  %1351 = vst [vmem:[%s1348 + $0x10] sm:$0xff] %v541
  %1352 = vst [vmem:[%s1348 + $0x18] sm:$0xff] %v542
  %s1353 = scalar_lea.vmem %s7, 64
  %1354 = vst [vmem:[%s1353] sm:$0xff] %v1322
  %1355 = vst [vmem:[%s1353 + $0x8] sm:$0xff] %v1323
  %1356 = vst [vmem:[%s1353 + $0x10] sm:$0xff] %v1326
  %1357 = vst [vmem:[%s1353 + $0x18] sm:$0xff] %v1327
  %1358 = vst [vmem:[%s1353 + $0x20] sm:$0xff] %v1330
  %1359 = vst [vmem:[%s1353 + $0x28] sm:$0xff] %v1331
  %1360 = vst [vmem:[%s1353 + $0x30] sm:$0xff] %v1334
  %1361 = vst [vmem:[%s1353 + $0x38] sm:$0xff] %v1335
  // Predicated region
  $region26: #{my_model_forward.1} parent=0 // pred_check
    _
  $region27: #{my_model_forward.1} parent=0 // pred_check_branch
    %1363 = sbr.rel (0) target = $region29
  $region28: #{my_model_forward.1} parent=0 // pred_region
    _
  $region29: #{my_model_forward.1} parent=0 // pred_fallthru
    _
  // Predicated region
  $region30: #{my_model_forward.1} parent=0 // pred_check
    _
  $region31: #{my_model_forward.1} parent=0 // pred_check_branch
    %1365 = sbr.rel (0) target = $region33
  $region32: #{my_model_forward.1} parent=0 // pred_region
    _
  $region33: #{my_model_forward.1} parent=0 // pred_fallthru
    _
  // Predicated region
  $region34: #{my_model_forward.1} parent=0 // pred_check
    _
  $region35: #{my_model_forward.1} parent=0 // pred_check_branch
    %1367 = sbr.rel (0) target = $region37
  $region36: #{my_model_forward.1} parent=0 // pred_region
    _
  $region37: #{my_model_forward.1} parent=0 // pred_fallthru
    _
  // Predicated region
  $region38: #{my_model_forward.1} parent=0 // pred_check
    _
  $region39: #{my_model_forward.1} parent=0 // pred_check_branch
    %1369 = sbr.rel (0) target = $region41
  $region40: #{my_model_forward.1} parent=0 // pred_region
    _
  $region41: #{my_model_forward.1} parent=0 // pred_fallthru
    _

</llo_original>
